<compile_context>
chip_gen: v7x
topology: tpu7x:2x2x1
jax: 0.10.0
libtpu: 0.0.40
codegen_flags: <defaults>
</compile_context>

<pallas_src>
import functools

import numpy as np
import jax
import jax.numpy as jnp
from jax import lax
from jax.experimental import pallas as pl
from jax.experimental.pallas import tpu as pltpu

# ---------------------------------------------------------------------------
# Module configuration (shapes mirror ValueNetwork.__init__).
# ---------------------------------------------------------------------------
INPUT_DIM = 13
SELF_STATE_DIM = 6
MLP1_DIMS = [64, 32]          # mlp1: last_relu=True
MLP2_DIMS = [32, 32]          # mlp2
ATTENTION_DIMS = [32, 32, 1]  # attention (input = 2 * mlp1_dims[-1], global state on)
MLP3_DIMS = [64, 32, 1]       # mlp3 (input = mlp2_dims[-1] + self_state_dim)
WITH_GLOBAL_STATE = True
# cell_size / cell_num are stored by __init__ but unused in forward().


# ---------------------------------------------------------------------------
# Parameter initialization (deterministic, synthetic).
# ---------------------------------------------------------------------------
def _init_mlp(key, in_dim, dims):
    params = []
    d_in = in_dim
    for d_out in dims:
        key, kw, kb = jax.random.split(key, 3)
        w = jax.random.normal(kw, (d_in, d_out), jnp.float32) * (1.0 / np.sqrt(d_in))
        b = jax.random.normal(kb, (1, d_out), jnp.float32) * 0.05
        params += [w, b]
        d_in = d_out
    return key, params


def init_params(seed=1):
    key = jax.random.PRNGKey(seed)
    h1 = MLP1_DIMS[-1]
    att_in = 2 * h1 if WITH_GLOBAL_STATE else h1
    mlp3_in = MLP2_DIMS[-1] + SELF_STATE_DIM
    key, p1 = _init_mlp(key, INPUT_DIM, MLP1_DIMS)
    key, p2 = _init_mlp(key, h1, MLP2_DIMS)
    key, pa = _init_mlp(key, att_in, ATTENTION_DIMS)
    key, p3 = _init_mlp(key, mlp3_in, MLP3_DIMS)
    return p1 + p2 + pa + p3


def _pack_params(params):
    """Rearrange weights so the kernel never concatenates activations and so the
    two matmuls that consume mlp1's output fuse into a single 64-wide matmul."""
    (w1a, b1a, w1b, b1b,
     w2a, b2a, w2b, b2b,
     wa1, ba1, wa2, ba2, wa3, ba3,
     w3a, b3a, w3b, b3b, w3c, b3c) = params
    h1 = MLP1_DIMS[-1]
    h2a = MLP2_DIMS[0]
    wa1_h, wa1_g = wa1[:h1], wa1[h1:]                   # rows for h1 / global state
    # Fused weight/bias: h1 @ [w2a | wa1_h] + [b2a | ba1]  (one 64-lane matmul).
    w_h1f = jnp.concatenate([w2a, wa1_h], axis=1)       # (32, 64)
    b_h1f = jnp.concatenate([b2a, ba1], axis=1)         # (1, 64)
    # Global-state weight zero-padded so it only hits the attention lanes.
    wg = jnp.concatenate([jnp.zeros((h1, h2a), jnp.float32), wa1_g], axis=1)  # (32, 64)
    # mlp3 layer-1 split into self-state rows and weighted-feature rows.
    w3s, w3f = w3a[:SELF_STATE_DIM], w3a[SELF_STATE_DIM:]
    # Final (32, 1) value head pre-transposed so the kernel emits a (1, TB) row.
    w3c_t = jnp.transpose(w3c)                          # (1, 32)
    return [w1a, b1a, w1b, b1b,
            w_h1f, b_h1f, wg,
            w2b, b2b,
            wa2, ba2, wa3, ba3,
            w3s, w3f, b3a, w3b, b3b, w3c_t, b3c]


def _round_up(x, m):
    return ((x + m - 1) // m) * m


# ---------------------------------------------------------------------------
# Pallas kernel: one grid step processes TB batch samples (TB*N matmul rows).
# ---------------------------------------------------------------------------
def value_net_kernel(state_ref, self_state_ref,
                     w1a, b1a, w1b, b1b,
                     wf, bf, wg,
                     w2b, b2b,
                     wa2, ba2, wa3, ba3,
                     w3s, w3f, b3a, w3b, b3b, w3c_t, b3c,
                     out_ref, *, tb, n, h_split):
    f32 = jnp.float32

    x3 = state_ref[...]                                   # (TB, N, D)
    d = x3.shape[-1]
    x = x3.reshape(tb * n, d)                             # (TB*N, D)

    # mlp1 (last_relu=True).
    h = jnp.maximum(jnp.dot(x, w1a[...], preferred_element_type=f32) + b1a[...], 0.0)
    h1 = jnp.maximum(jnp.dot(h, w1b[...], preferred_element_type=f32) + b1b[...], 0.0)  # (TB*N, H1)
    h1_dim = h1.shape[-1]

    # Per-sample global state: mean of mlp1 output over the human axis.
    gs = jnp.mean(h1.reshape(tb, n, h1_dim), axis=1)      # (TB, H1)

    # Fused 64-wide matmul: h1 @ [w2a | wa1_h] + [b2a | ba1].
    fused = jnp.dot(h1, wf[...], preferred_element_type=f32) + bf[...]     # (TB*N, 64)
    f_dim = fused.shape[-1]
    # Global-state weight is zero in the mlp2 lanes, so one broadcast-add plus
    # one ReLU covers both the mlp2 layer-1 and attention layer-1 outputs.
    g_term = jnp.dot(gs, wg[...], preferred_element_type=f32)              # (TB, 64)
    fused = jnp.maximum(fused.reshape(tb, n, f_dim) + g_term[:, None, :], 0.0)

    mlp2_h = fused[:, :, :h_split].reshape(tb * n, h_split)           # (TB*N, 32)
    att_a = fused[:, :, h_split:].reshape(tb * n, f_dim - h_split)    # (TB*N, 32)

    # mlp2 layer 2 (no final ReLU).
    h2 = jnp.dot(mlp2_h, w2b[...], preferred_element_type=f32) + b2b[...]  # (TB*N, H2)
    h2_dim = h2.shape[-1]

    # Attention layers 2 & 3.
    a = jnp.maximum(jnp.dot(att_a, wa2[...], preferred_element_type=f32) + ba2[...], 0.0)
    scores = jnp.dot(a, wa3[...], preferred_element_type=f32) + ba3[...]   # (TB*N, 1)

    # Softmax-like weighting (faithful to the reference: exp + (scores != 0)
    # mask, no max-subtraction), batched per sample over the human axis.
    scores3 = scores.reshape(tb, n, 1)                    # (TB, N, 1)
    scores_exp = jnp.exp(scores3) * (scores3 != 0.0).astype(f32)
    denom = jnp.sum(scores_exp, axis=1)                   # (TB, 1)
    w_sum = jnp.sum(scores_exp * h2.reshape(tb, n, h2_dim), axis=1)        # (TB, H2)
    weighted = w_sum * pl.reciprocal(denom, approx=False)  # one normalize per sample

    # mlp3: concat([self_state, weighted]) @ W3a == two matmuls into one acc.
    self_state = self_state_ref[...]                      # (TB, S) pre-sliced in wrapper
    j = (jnp.dot(self_state, w3s[...], preferred_element_type=f32)
         + jnp.dot(weighted, w3f[...], preferred_element_type=f32)
         + b3a[...])
    j = jnp.maximum(j, 0.0)
    j = jnp.maximum(jnp.dot(j, w3b[...], preferred_element_type=f32) + b3b[...], 0.0)

    # Final value head, lane-dense: (1, 32) . (TB, 32) contracted on features
    # gives a (1, TB) row, so the output writeback is a dense vst instead of a
    # 1/128-lane masked store.
    value_row = lax.dot_general(w3c_t[...], j, (((1,), (1,)), ((), ())),
                                preferred_element_type=f32) + b3c[...]
    out_ref[...] = value_row


# ---------------------------------------------------------------------------
# Wrapper.
# ---------------------------------------------------------------------------
def value_network_forward(state, params, tb=None):
    B, N, D = state.shape
    assert MLP3_DIMS[-1] == 1  # lane-dense output path assumes a scalar value head

    if tb is None:
        if B >= 16:
            # Keep >= 2 grid steps so the "parallel" batch axis shards across
            # both TensorCores on v7x; cap at 256 samples (2048 matmul rows)
            # per step to bound the live VMEM working set on every generation.
            tb = min(256, _round_up((B + 1) // 2, 8))
        else:
            tb = max(8, _round_up(B, 8))
    else:
        tb = max(8, _round_up(tb, 8))

    b_pad = _round_up(B, tb)
    grid_b = b_pad // tb

    # Slice self_state in the wrapper (free XLA op) instead of an in-kernel
    # stride-8 sublane gather; DMA'd as its own small (tb, 6) block.
    self_state = state[:, 0, :SELF_STATE_DIM]
    if b_pad != B:
        state = jnp.pad(state, ((0, b_pad - B), (0, 0), (0, 0)))
        self_state = jnp.pad(self_state, ((0, b_pad - B), (0, 0)))

    kparams = _pack_params(params)

    in_specs = [pl.BlockSpec((tb, N, D), lambda b: (b, 0, 0)),
                pl.BlockSpec((tb, SELF_STATE_DIM), lambda b: (b, 0))]
    for p in kparams:
        in_specs.append(pl.BlockSpec(p.shape, lambda b: (0, 0)))
    # Lane-dense output: one (1, TB) row per grid step.
    out_specs = pl.BlockSpec((1, tb), lambda b: (b, 0))

    kernel = functools.partial(value_net_kernel, tb=tb, n=N, h_split=MLP2_DIMS[0])

    out = pl.pallas_call(
        kernel,
        grid=(grid_b,),
        in_specs=in_specs,
        out_specs=out_specs,
        out_shape=jax.ShapeDtypeStruct((grid_b, tb), jnp.float32),
        compiler_params=pltpu.CompilerParams(
            dimension_semantics=("parallel",),
            vmem_limit_bytes=32 * 1024 * 1024),
    )(state, self_state, *kparams)

    # (grid, TB) lane-dense rows -> (B, 1) column matching the PyTorch output.
    return out.reshape(b_pad, 1)[:B]


# ---------------------------------------------------------------------------
# Pure-JAX reference (mirrors the PyTorch forward exactly) for validation.
# ---------------------------------------------------------------------------
def ref_forward(state, params):
    B, N, D = state.shape

    def apply(x, ps, last_relu):
        n = len(ps) // 2
        for i in range(n):
            x = x @ ps[2 * i] + ps[2 * i + 1]
            if i != n - 1 or last_relu:
                x = jnp.maximum(x, 0.0)
        return x

    i = 0
    p1 = params[i:i + 2 * len(MLP1_DIMS)]; i += 2 * len(MLP1_DIMS)
    p2 = params[i:i + 2 * len(MLP2_DIMS)]; i += 2 * len(MLP2_DIMS)
    pa = params[i:i + 2 * len(ATTENTION_DIMS)]; i += 2 * len(ATTENTION_DIMS)
    p3 = params[i:i + 2 * len(MLP3_DIMS)]

    x = state.reshape(B * N, D)
    h1 = apply(x, p1, True)
    h2 = apply(h1, p2, False)
    gs = jnp.mean(h1.reshape(B, N, -1), axis=1, keepdims=True)
    gs = jnp.broadcast_to(gs, (B, N, gs.shape[-1])).reshape(B * N, -1)
    att_in = jnp.concatenate([h1, gs], axis=1)
    scores = apply(att_in, pa, False).reshape(B, N)
    scores_exp = jnp.exp(scores) * (scores != 0.0).astype(jnp.float32)
    weights = (scores_exp / jnp.sum(scores_exp, axis=1, keepdims=True))[:, :, None]
    feats = h2.reshape(B, N, -1)
    weighted = jnp.sum(weights * feats, axis=1)
    self_state = state[:, 0, :SELF_STATE_DIM]
    joint = jnp.concatenate([self_state, weighted], axis=1)
    return apply(joint, p3, False)


if __name__ == "__main__":
    params = init_params(seed=1)

    # Small case consistent with the module: batch=2, 8 humans, 13-dim rotated state.
    B, N = 2, 8
    state = jax.random.normal(jax.random.PRNGKey(0), (B, N, INPUT_DIM), jnp.float32)
    value = jax.block_until_ready(value_network_forward(state, params))
    expected = ref_forward(state, params)
    np.testing.assert_allclose(np.asarray(value), np.asarray(expected),
                               rtol=1e-4, atol=1e-4)

    # Second check: batch not divisible by the tile; default tb gives a 2-step
    # grid (dual-TC path on v7x) plus the padding path.
    B2 = 37
    state2 = jax.random.normal(jax.random.PRNGKey(2), (B2, N, INPUT_DIM), jnp.float32)
    value2 = jax.block_until_ready(value_network_forward(state2, params))
    expected2 = ref_forward(state2, params)
    np.testing.assert_allclose(np.asarray(value2), np.asarray(expected2),
                               rtol=1e-4, atol=1e-4)

    # Third check: explicit user-chosen tile (multi-step grid, 3 steps).
    value3 = jax.block_until_ready(value_network_forward(state2, params, tb=16))
    np.testing.assert_allclose(np.asarray(value3), np.asarray(expected2),
                               rtol=1e-4, atol=1e-4)

    print("KERNEL_OK")
</pallas_src>

<mosaic_0001>
module attributes {stable_mosaic.version = 11 : i64} {
  func.func @value_net_kernel(%arg0: i32, %arg1: memref<8x8x13xf32, #tpu.memory_space<vmem>>, %arg2: memref<8x6xf32, #tpu.memory_space<vmem>>, %arg3: memref<13x64xf32, #tpu.memory_space<vmem>>, %arg4: memref<1x64xf32, #tpu.memory_space<vmem>>, %arg5: memref<64x32xf32, #tpu.memory_space<vmem>>, %arg6: memref<1x32xf32, #tpu.memory_space<vmem>>, %arg7: memref<32x64xf32, #tpu.memory_space<vmem>>, %arg8: memref<1x64xf32, #tpu.memory_space<vmem>>, %arg9: memref<32x64xf32, #tpu.memory_space<vmem>>, %arg10: memref<32x32xf32, #tpu.memory_space<vmem>>, %arg11: memref<1x32xf32, #tpu.memory_space<vmem>>, %arg12: memref<32x32xf32, #tpu.memory_space<vmem>>, %arg13: memref<1x32xf32, #tpu.memory_space<vmem>>, %arg14: memref<32x1xf32, #tpu.memory_space<vmem>>, %arg15: memref<1x1xf32, #tpu.memory_space<vmem>>, %arg16: memref<6x64xf32, #tpu.memory_space<vmem>>, %arg17: memref<32x64xf32, #tpu.memory_space<vmem>>, %arg18: memref<1x64xf32, #tpu.memory_space<vmem>>, %arg19: memref<64x32xf32, #tpu.memory_space<vmem>>, %arg20: memref<1x32xf32, #tpu.memory_space<vmem>>, %arg21: memref<1x32xf32, #tpu.memory_space<vmem>>, %arg22: memref<1x1xf32, #tpu.memory_space<vmem>>, %arg23: memref<1x8xf32, #tpu.memory_space<vmem>>) attributes {dimension_semantics = [#tpu.dimension_semantics<parallel>], iteration_bounds = array<i64: 1>, scalar_prefetch = 0 : i64, scratch_operands = 0 : i64, tpu.core_type = #tpu.core_type<tc>, window_params = [{transform_indices = @transform_0, window_bounds = array<i64: 8, 8, 13>}, {transform_indices = @transform_1, window_bounds = array<i64: 8, 6>}, {pipeline_mode = #tpu.pipeline_mode<synchronous>, transform_indices = @transform_2, window_bounds = array<i64: 13, 64>}, {pipeline_mode = #tpu.pipeline_mode<synchronous>, transform_indices = @transform_3, window_bounds = array<i64: 1, 64>}, {pipeline_mode = #tpu.pipeline_mode<synchronous>, transform_indices = @transform_4, window_bounds = array<i64: 64, 32>}, {pipeline_mode = #tpu.pipeline_mode<synchronous>, transform_indices = @transform_5, window_bounds = array<i64: 1, 32>}, {pipeline_mode = #tpu.pipeline_mode<synchronous>, transform_indices = @transform_6, window_bounds = array<i64: 32, 64>}, {pipeline_mode = #tpu.pipeline_mode<synchronous>, transform_indices = @transform_7, window_bounds = array<i64: 1, 64>}, {pipeline_mode = #tpu.pipeline_mode<synchronous>, transform_indices = @transform_8, window_bounds = array<i64: 32, 64>}, {pipeline_mode = #tpu.pipeline_mode<synchronous>, transform_indices = @transform_9, window_bounds = array<i64: 32, 32>}, {pipeline_mode = #tpu.pipeline_mode<synchronous>, transform_indices = @transform_10, window_bounds = array<i64: 1, 32>}, {pipeline_mode = #tpu.pipeline_mode<synchronous>, transform_indices = @transform_11, window_bounds = array<i64: 32, 32>}, {pipeline_mode = #tpu.pipeline_mode<synchronous>, transform_indices = @transform_12, window_bounds = array<i64: 1, 32>}, {pipeline_mode = #tpu.pipeline_mode<synchronous>, transform_indices = @transform_13, window_bounds = array<i64: 32, 1>}, {pipeline_mode = #tpu.pipeline_mode<synchronous>, transform_indices = @transform_14, window_bounds = array<i64: 1, 1>}, {pipeline_mode = #tpu.pipeline_mode<synchronous>, transform_indices = @transform_15, window_bounds = array<i64: 6, 64>}, {pipeline_mode = #tpu.pipeline_mode<synchronous>, transform_indices = @transform_16, window_bounds = array<i64: 32, 64>}, {pipeline_mode = #tpu.pipeline_mode<synchronous>, transform_indices = @transform_17, window_bounds = array<i64: 1, 64>}, {pipeline_mode = #tpu.pipeline_mode<synchronous>, transform_indices = @transform_18, window_bounds = array<i64: 64, 32>}, {pipeline_mode = #tpu.pipeline_mode<synchronous>, transform_indices = @transform_19, window_bounds = array<i64: 1, 32>}, {pipeline_mode = #tpu.pipeline_mode<synchronous>, transform_indices = @transform_20, window_bounds = array<i64: 1, 32>}, {pipeline_mode = #tpu.pipeline_mode<synchronous>, transform_indices = @transform_21, window_bounds = array<i64: 1, 1>}, {transform_indices = @transform_22, window_bounds = array<i64: 1, 8>}]} {
    %c0 = arith.constant 0 : index
    %c0_0 = arith.constant 0 : index
    %c0_1 = arith.constant 0 : index
    %0 = vector.load %arg1[%c0, %c0_0, %c0_1] : memref<8x8x13xf32, #tpu.memory_space<vmem>>, vector<8x8x13xf32>
    %1 = vector.shape_cast %0 : vector<8x8x13xf32> to vector<64x13xf32>
    %c0_2 = arith.constant 0 : index
    %c0_3 = arith.constant 0 : index
    %2 = vector.load %arg3[%c0_2, %c0_3] : memref<13x64xf32, #tpu.memory_space<vmem>>, vector<13x64xf32>
    %cst = arith.constant dense<0.000000e+00> : vector<64x64xf32>
    %3 = tpu.matmul %1, %2, %cst {dimension_numbers = #tpu.dot_dimension_numbers<[1], [0], [0], [1], [0, 0, 1, 1], [], []>} : vector<64x13xf32>, vector<13x64xf32>, vector<64x64xf32> -> vector<64x64xf32>
    %c0_4 = arith.constant 0 : index
    %c0_5 = arith.constant 0 : index
    %4 = vector.load %arg4[%c0_4, %c0_5] : memref<1x64xf32, #tpu.memory_space<vmem>>, vector<1x64xf32>
    %5 = vector.broadcast %4 : vector<1x64xf32> to vector<64x64xf32>
    %6 = arith.addf %3, %5 : vector<64x64xf32>
    %cst_6 = arith.constant 0.000000e+00 : f32
    %7 = vector.broadcast %cst_6 : f32 to vector<64x64xf32>
    %8 = arith.maximumf %6, %7 : vector<64x64xf32>
    %c0_7 = arith.constant 0 : index
    %c0_8 = arith.constant 0 : index
    %9 = vector.load %arg5[%c0_7, %c0_8] : memref<64x32xf32, #tpu.memory_space<vmem>>, vector<64x32xf32>
    %cst_9 = arith.constant dense<0.000000e+00> : vector<64x32xf32>
    %10 = tpu.matmul %8, %9, %cst_9 {dimension_numbers = #tpu.dot_dimension_numbers<[1], [0], [0], [1], [0, 0, 1, 1], [], []>} : vector<64x64xf32>, vector<64x32xf32>, vector<64x32xf32> -> vector<64x32xf32>
    %c0_10 = arith.constant 0 : index
    %c0_11 = arith.constant 0 : index
    %11 = vector.load %arg6[%c0_10, %c0_11] : memref<1x32xf32, #tpu.memory_space<vmem>>, vector<1x32xf32>
    %12 = vector.broadcast %11 : vector<1x32xf32> to vector<64x32xf32>
    %13 = arith.addf %10, %12 : vector<64x32xf32>
    %cst_12 = arith.constant 0.000000e+00 : f32
    %14 = vector.broadcast %cst_12 : f32 to vector<64x32xf32>
    %15 = arith.maximumf %13, %14 : vector<64x32xf32>
    %16 = vector.shape_cast %15 : vector<64x32xf32> to vector<8x8x32xf32>
    %cst_13 = arith.constant dense<0.000000e+00> : vector<8x32xf32>
    %17 = vector.multi_reduction <add>, %16, %cst_13 [1] : vector<8x8x32xf32> to vector<8x32xf32>
    %cst_14 = arith.constant 8.000000e+00 : f32
    %18 = vector.broadcast %cst_14 : f32 to vector<8x32xf32>
    %19 = arith.divf %17, %18 : vector<8x32xf32>
    %c0_15 = arith.constant 0 : index
    %c0_16 = arith.constant 0 : index
    %20 = vector.load %arg7[%c0_15, %c0_16] : memref<32x64xf32, #tpu.memory_space<vmem>>, vector<32x64xf32>
    %cst_17 = arith.constant dense<0.000000e+00> : vector<64x64xf32>
    %21 = tpu.matmul %15, %20, %cst_17 {dimension_numbers = #tpu.dot_dimension_numbers<[1], [0], [0], [1], [0, 0, 1, 1], [], []>} : vector<64x32xf32>, vector<32x64xf32>, vector<64x64xf32> -> vector<64x64xf32>
    %c0_18 = arith.constant 0 : index
    %c0_19 = arith.constant 0 : index
    %22 = vector.load %arg8[%c0_18, %c0_19] : memref<1x64xf32, #tpu.memory_space<vmem>>, vector<1x64xf32>
    %23 = vector.broadcast %22 : vector<1x64xf32> to vector<64x64xf32>
    %24 = arith.addf %21, %23 : vector<64x64xf32>
    %c0_20 = arith.constant 0 : index
    %c0_21 = arith.constant 0 : index
    %25 = vector.load %arg9[%c0_20, %c0_21] : memref<32x64xf32, #tpu.memory_space<vmem>>, vector<32x64xf32>
    %cst_22 = arith.constant dense<0.000000e+00> : vector<8x64xf32>
    %26 = tpu.matmul %19, %25, %cst_22 {dimension_numbers = #tpu.dot_dimension_numbers<[1], [0], [0], [1], [0, 0, 1, 1], [], []>} : vector<8x32xf32>, vector<32x64xf32>, vector<8x64xf32> -> vector<8x64xf32>
    %27 = vector.shape_cast %24 : vector<64x64xf32> to vector<8x8x64xf32>
    %28 = vector.shape_cast %26 : vector<8x64xf32> to vector<8x1x64xf32>
    %29 = vector.broadcast %28 : vector<8x1x64xf32> to vector<8x8x64xf32>
    %30 = arith.addf %27, %29 : vector<8x8x64xf32>
    %cst_23 = arith.constant 0.000000e+00 : f32
    %31 = vector.broadcast %cst_23 : f32 to vector<8x8x64xf32>
    %32 = arith.maximumf %30, %31 : vector<8x8x64xf32>
    %33 = vector.extract_strided_slice %32 {offsets = [0, 0, 0], sizes = [8, 8, 32], strides = [1, 1, 1]} : vector<8x8x64xf32> to vector<8x8x32xf32>
    %34 = vector.shape_cast %33 : vector<8x8x32xf32> to vector<64x32xf32>
    %35 = vector.extract_strided_slice %32 {offsets = [0, 0, 32], sizes = [8, 8, 32], strides = [1, 1, 1]} : vector<8x8x64xf32> to vector<8x8x32xf32>
    %36 = vector.shape_cast %35 : vector<8x8x32xf32> to vector<64x32xf32>
    %c0_24 = arith.constant 0 : index
    %c0_25 = arith.constant 0 : index
    %37 = vector.load %arg10[%c0_24, %c0_25] : memref<32x32xf32, #tpu.memory_space<vmem>>, vector<32x32xf32>
    %cst_26 = arith.constant dense<0.000000e+00> : vector<64x32xf32>
    %38 = tpu.matmul %34, %37, %cst_26 {dimension_numbers = #tpu.dot_dimension_numbers<[1], [0], [0], [1], [0, 0, 1, 1], [], []>} : vector<64x32xf32>, vector<32x32xf32>, vector<64x32xf32> -> vector<64x32xf32>
    %c0_27 = arith.constant 0 : index
    %c0_28 = arith.constant 0 : index
    %39 = vector.load %arg11[%c0_27, %c0_28] : memref<1x32xf32, #tpu.memory_space<vmem>>, vector<1x32xf32>
    %40 = vector.broadcast %39 : vector<1x32xf32> to vector<64x32xf32>
    %41 = arith.addf %38, %40 : vector<64x32xf32>
    %c0_29 = arith.constant 0 : index
    %c0_30 = arith.constant 0 : index
    %42 = vector.load %arg12[%c0_29, %c0_30] : memref<32x32xf32, #tpu.memory_space<vmem>>, vector<32x32xf32>
    %cst_31 = arith.constant dense<0.000000e+00> : vector<64x32xf32>
    %43 = tpu.matmul %36, %42, %cst_31 {dimension_numbers = #tpu.dot_dimension_numbers<[1], [0], [0], [1], [0, 0, 1, 1], [], []>} : vector<64x32xf32>, vector<32x32xf32>, vector<64x32xf32> -> vector<64x32xf32>
    %c0_32 = arith.constant 0 : index
    %c0_33 = arith.constant 0 : index
    %44 = vector.load %arg13[%c0_32, %c0_33] : memref<1x32xf32, #tpu.memory_space<vmem>>, vector<1x32xf32>
    %45 = vector.broadcast %44 : vector<1x32xf32> to vector<64x32xf32>
    %46 = arith.addf %43, %45 : vector<64x32xf32>
    %cst_34 = arith.constant 0.000000e+00 : f32
    %47 = vector.broadcast %cst_34 : f32 to vector<64x32xf32>
    %48 = arith.maximumf %46, %47 : vector<64x32xf32>
    %c0_35 = arith.constant 0 : index
    %c0_36 = arith.constant 0 : index
    %49 = vector.load %arg14[%c0_35, %c0_36] : memref<32x1xf32, #tpu.memory_space<vmem>>, vector<32x1xf32>
    %cst_37 = arith.constant dense<0.000000e+00> : vector<64x1xf32>
    %50 = tpu.matmul %48, %49, %cst_37 {dimension_numbers = #tpu.dot_dimension_numbers<[1], [0], [0], [1], [0, 0, 1, 1], [], []>} : vector<64x32xf32>, vector<32x1xf32>, vector<64x1xf32> -> vector<64x1xf32>
    %c0_38 = arith.constant 0 : index
    %c0_39 = arith.constant 0 : index
    %51 = vector.load %arg15[%c0_38, %c0_39] : memref<1x1xf32, #tpu.memory_space<vmem>>, vector<1x1xf32>
    %52 = vector.broadcast %51 : vector<1x1xf32> to vector<64x1xf32>
    %53 = arith.addf %50, %52 : vector<64x1xf32>
    %54 = vector.shape_cast %53 : vector<64x1xf32> to vector<8x8x1xf32>
    %55 = math.exp %54 : vector<8x8x1xf32>
    %cst_40 = arith.constant 0.000000e+00 : f32
    %56 = vector.broadcast %cst_40 : f32 to vector<8x8x1xf32>
    %57 = arith.cmpf one, %54, %56 : vector<8x8x1xf32>
    %58 = arith.extui %57 : vector<8x8x1xi1> to vector<8x8x1xi32>
    %59 = arith.sitofp %58 : vector<8x8x1xi32> to vector<8x8x1xf32>
    %60 = arith.mulf %55, %59 : vector<8x8x1xf32>
    %cst_41 = arith.constant dense<0.000000e+00> : vector<8x1xf32>
    %61 = vector.multi_reduction <add>, %60, %cst_41 [1] : vector<8x8x1xf32> to vector<8x1xf32>
    %62 = vector.shape_cast %41 : vector<64x32xf32> to vector<8x8x32xf32>
    %63 = vector.broadcast %60 : vector<8x8x1xf32> to vector<8x8x32xf32>
    %64 = arith.mulf %63, %62 : vector<8x8x32xf32>
    %cst_42 = arith.constant dense<0.000000e+00> : vector<8x32xf32>
    %65 = vector.multi_reduction <add>, %64, %cst_42 [1] : vector<8x8x32xf32> to vector<8x32xf32>
    %66 = tpu.reciprocal %61 : vector<8x1xf32> -> vector<8x1xf32>
    %67 = vector.broadcast %66 : vector<8x1xf32> to vector<8x32xf32>
    %68 = arith.mulf %65, %67 : vector<8x32xf32>
    %c0_43 = arith.constant 0 : index
    %c0_44 = arith.constant 0 : index
    %69 = vector.load %arg2[%c0_43, %c0_44] : memref<8x6xf32, #tpu.memory_space<vmem>>, vector<8x6xf32>
    %c0_45 = arith.constant 0 : index
    %c0_46 = arith.constant 0 : index
    %70 = vector.load %arg16[%c0_45, %c0_46] : memref<6x64xf32, #tpu.memory_space<vmem>>, vector<6x64xf32>
    %cst_47 = arith.constant dense<0.000000e+00> : vector<8x64xf32>
    %71 = tpu.matmul %69, %70, %cst_47 {dimension_numbers = #tpu.dot_dimension_numbers<[1], [0], [0], [1], [0, 0, 1, 1], [], []>} : vector<8x6xf32>, vector<6x64xf32>, vector<8x64xf32> -> vector<8x64xf32>
    %c0_48 = arith.constant 0 : index
    %c0_49 = arith.constant 0 : index
    %72 = vector.load %arg17[%c0_48, %c0_49] : memref<32x64xf32, #tpu.memory_space<vmem>>, vector<32x64xf32>
    %cst_50 = arith.constant dense<0.000000e+00> : vector<8x64xf32>
    %73 = tpu.matmul %68, %72, %cst_50 {dimension_numbers = #tpu.dot_dimension_numbers<[1], [0], [0], [1], [0, 0, 1, 1], [], []>} : vector<8x32xf32>, vector<32x64xf32>, vector<8x64xf32> -> vector<8x64xf32>
    %74 = arith.addf %71, %73 : vector<8x64xf32>
    %c0_51 = arith.constant 0 : index
    %c0_52 = arith.constant 0 : index
    %75 = vector.load %arg18[%c0_51, %c0_52] : memref<1x64xf32, #tpu.memory_space<vmem>>, vector<1x64xf32>
    %76 = vector.broadcast %75 : vector<1x64xf32> to vector<8x64xf32>
    %77 = arith.addf %74, %76 : vector<8x64xf32>
    %cst_53 = arith.constant 0.000000e+00 : f32
    %78 = vector.broadcast %cst_53 : f32 to vector<8x64xf32>
    %79 = arith.maximumf %77, %78 : vector<8x64xf32>
    %c0_54 = arith.constant 0 : index
    %c0_55 = arith.constant 0 : index
    %80 = vector.load %arg19[%c0_54, %c0_55] : memref<64x32xf32, #tpu.memory_space<vmem>>, vector<64x32xf32>
    %cst_56 = arith.constant dense<0.000000e+00> : vector<8x32xf32>
    %81 = tpu.matmul %79, %80, %cst_56 {dimension_numbers = #tpu.dot_dimension_numbers<[1], [0], [0], [1], [0, 0, 1, 1], [], []>} : vector<8x64xf32>, vector<64x32xf32>, vector<8x32xf32> -> vector<8x32xf32>
    %c0_57 = arith.constant 0 : index
    %c0_58 = arith.constant 0 : index
    %82 = vector.load %arg20[%c0_57, %c0_58] : memref<1x32xf32, #tpu.memory_space<vmem>>, vector<1x32xf32>
    %83 = vector.broadcast %82 : vector<1x32xf32> to vector<8x32xf32>
    %84 = arith.addf %81, %83 : vector<8x32xf32>
    %cst_59 = arith.constant 0.000000e+00 : f32
    %85 = vector.broadcast %cst_59 : f32 to vector<8x32xf32>
    %86 = arith.maximumf %84, %85 : vector<8x32xf32>
    %c0_60 = arith.constant 0 : index
    %c0_61 = arith.constant 0 : index
    %87 = vector.load %arg21[%c0_60, %c0_61] : memref<1x32xf32, #tpu.memory_space<vmem>>, vector<1x32xf32>
    %cst_62 = arith.constant dense<0.000000e+00> : vector<1x8xf32>
    %88 = tpu.matmul %87, %86, %cst_62 {dimension_numbers = #tpu.dot_dimension_numbers<[1], [1], [0], [0], [0, 0, 1, 0], [], []>} : vector<1x32xf32>, vector<8x32xf32>, vector<1x8xf32> -> vector<1x8xf32>
    %c0_63 = arith.constant 0 : index
    %c0_64 = arith.constant 0 : index
    %89 = vector.load %arg22[%c0_63, %c0_64] : memref<1x1xf32, #tpu.memory_space<vmem>>, vector<1x1xf32>
    %90 = vector.broadcast %89 : vector<1x1xf32> to vector<1x8xf32>
    %91 = arith.addf %88, %90 : vector<1x8xf32>
    %c0_65 = arith.constant 0 : index
    %c0_66 = arith.constant 0 : index
    %92 = vector.load %arg23[%c0_65, %c0_66] : memref<1x8xf32, #tpu.memory_space<vmem>>, vector<1x8xf32>
    tpu.vector_store %arg23[%c0_65, %c0_66], %91 {strides = array<i32>} : memref<1x8xf32, #tpu.memory_space<vmem>>, vector<1x8xf32>,
    return
  }
  func.func @transform_0(%arg0: i32) -> (i32, i32, i32) {
    %c0_i32 = arith.constant 0 : i32
    %c0_i32_0 = arith.constant 0 : i32
    %c0_i32_1 = arith.constant 0 : i32
    return %arg0, %c0_i32, %c0_i32_0 : i32, i32, i32
  }
  func.func @transform_1(%arg0: i32) -> (i32, i32) {
    %c0_i32 = arith.constant 0 : i32
    %c0_i32_0 = arith.constant 0 : i32
    return %arg0, %c0_i32 : i32, i32
  }
  func.func @transform_2(%arg0: i32) -> (i32, i32) {
    %c0_i32 = arith.constant 0 : i32
    %c0_i32_0 = arith.constant 0 : i32
    %c0_i32_1 = arith.constant 0 : i32
    return %c0_i32, %c0_i32_0 : i32, i32
  }
  func.func @transform_3(%arg0: i32) -> (i32, i32) {
    %c0_i32 = arith.constant 0 : i32
    %c0_i32_0 = arith.constant 0 : i32
    %c0_i32_1 = arith.constant 0 : i32
    return %c0_i32, %c0_i32_0 : i32, i32
  }
  func.func @transform_4(%arg0: i32) -> (i32, i32) {
    %c0_i32 = arith.constant 0 : i32
    %c0_i32_0 = arith.constant 0 : i32
    %c0_i32_1 = arith.constant 0 : i32
    return %c0_i32, %c0_i32_0 : i32, i32
  }
  func.func @transform_5(%arg0: i32) -> (i32, i32) {
    %c0_i32 = arith.constant 0 : i32
    %c0_i32_0 = arith.constant 0 : i32
    %c0_i32_1 = arith.constant 0 : i32
    return %c0_i32, %c0_i32_0 : i32, i32
  }
  func.func @transform_6(%arg0: i32) -> (i32, i32) {
    %c0_i32 = arith.constant 0 : i32
    %c0_i32_0 = arith.constant 0 : i32
    %c0_i32_1 = arith.constant 0 : i32
    return %c0_i32, %c0_i32_0 : i32, i32
  }
  func.func @transform_7(%arg0: i32) -> (i32, i32) {
    %c0_i32 = arith.constant 0 : i32
    %c0_i32_0 = arith.constant 0 : i32
    %c0_i32_1 = arith.constant 0 : i32
    return %c0_i32, %c0_i32_0 : i32, i32
  }
  func.func @transform_8(%arg0: i32) -> (i32, i32) {
    %c0_i32 = arith.constant 0 : i32
    %c0_i32_0 = arith.constant 0 : i32
    %c0_i32_1 = arith.constant 0 : i32
    return %c0_i32, %c0_i32_0 : i32, i32
  }
  func.func @transform_9(%arg0: i32) -> (i32, i32) {
    %c0_i32 = arith.constant 0 : i32
    %c0_i32_0 = arith.constant 0 : i32
    %c0_i32_1 = arith.constant 0 : i32
    return %c0_i32, %c0_i32_0 : i32, i32
  }
  func.func @transform_10(%arg0: i32) -> (i32, i32) {
    %c0_i32 = arith.constant 0 : i32
    %c0_i32_0 = arith.constant 0 : i32
    %c0_i32_1 = arith.constant 0 : i32
    return %c0_i32, %c0_i32_0 : i32, i32
  }
  func.func @transform_11(%arg0: i32) -> (i32, i32) {
    %c0_i32 = arith.constant 0 : i32
    %c0_i32_0 = arith.constant 0 : i32
    %c0_i32_1 = arith.constant 0 : i32
    return %c0_i32, %c0_i32_0 : i32, i32
  }
  func.func @transform_12(%arg0: i32) -> (i32, i32) {
    %c0_i32 = arith.constant 0 : i32
    %c0_i32_0 = arith.constant 0 : i32
    %c0_i32_1 = arith.constant 0 : i32
    return %c0_i32, %c0_i32_0 : i32, i32
  }
  func.func @transform_13(%arg0: i32) -> (i32, i32) {
    %c0_i32 = arith.constant 0 : i32
    %c0_i32_0 = arith.constant 0 : i32
    %c0_i32_1 = arith.constant 0 : i32
    return %c0_i32, %c0_i32_0 : i32, i32
  }
  func.func @transform_14(%arg0: i32) -> (i32, i32) {
    %c0_i32 = arith.constant 0 : i32
    %c0_i32_0 = arith.constant 0 : i32
    %c0_i32_1 = arith.constant 0 : i32
    return %c0_i32, %c0_i32_0 : i32, i32
  }
  func.func @transform_15(%arg0: i32) -> (i32, i32) {
    %c0_i32 = arith.constant 0 : i32
    %c0_i32_0 = arith.constant 0 : i32
    %c0_i32_1 = arith.constant 0 : i32
    return %c0_i32, %c0_i32_0 : i32, i32
  }
  func.func @transform_16(%arg0: i32) -> (i32, i32) {
    %c0_i32 = arith.constant 0 : i32
    %c0_i32_0 = arith.constant 0 : i32
    %c0_i32_1 = arith.constant 0 : i32
    return %c0_i32, %c0_i32_0 : i32, i32
  }
  func.func @transform_17(%arg0: i32) -> (i32, i32) {
    %c0_i32 = arith.constant 0 : i32
    %c0_i32_0 = arith.constant 0 : i32
    %c0_i32_1 = arith.constant 0 : i32
    return %c0_i32, %c0_i32_0 : i32, i32
  }
  func.func @transform_18(%arg0: i32) -> (i32, i32) {
    %c0_i32 = arith.constant 0 : i32
    %c0_i32_0 = arith.constant 0 : i32
    %c0_i32_1 = arith.constant 0 : i32
    return %c0_i32, %c0_i32_0 : i32, i32
  }
  func.func @transform_19(%arg0: i32) -> (i32, i32) {
    %c0_i32 = arith.constant 0 : i32
    %c0_i32_0 = arith.constant 0 : i32
    %c0_i32_1 = arith.constant 0 : i32
    return %c0_i32, %c0_i32_0 : i32, i32
  }
  func.func @transform_20(%arg0: i32) -> (i32, i32) {
    %c0_i32 = arith.constant 0 : i32
    %c0_i32_0 = arith.constant 0 : i32
    %c0_i32_1 = arith.constant 0 : i32
    return %c0_i32, %c0_i32_0 : i32, i32
  }
  func.func @transform_21(%arg0: i32) -> (i32, i32) {
    %c0_i32 = arith.constant 0 : i32
    %c0_i32_0 = arith.constant 0 : i32
    %c0_i32_1 = arith.constant 0 : i32
    return %c0_i32, %c0_i32_0 : i32, i32
  }
  func.func @transform_22(%arg0: i32) -> (i32, i32) {
    %c0_i32 = arith.constant 0 : i32
    %c0_i32_0 = arith.constant 0 : i32
    return %arg0, %c0_i32 : i32, i32
  }
}

</mosaic_0001>

<llo_original>
// kernel: tpu_custom_call.1
$region0: #{tpu_custom_call.1}
  #allocation0 [shape = 'u32[]', space=smem, size = 0x4, offset = 0x4, fixed_abs, tag = 'smem constant byte address 0x4 - core index']
  #allocation1 [shape = 'u32[144,128]{1,0:T(1,128)}', space=vmem, size = 0x12000, scoped, tag = 'internal scratch']
  #allocation2 [shape = 'f32[1,1]{1,0:T(1,128)S(1)}', space=vmem, size = 0x200, scoped, tag = 'scoped memory for tpu_custom_call.1']
  #allocation3 [shape = 'f32[1,1]{1,0:T(1,128)S(1)}', space=vmem, size = 0x200, scoped, tag = 'scoped memory for tpu_custom_call.1']
  %s0 = inlined_call_operand.vmem [shape: f32[8,8,13], index: 0, kind: input, shape index: {}]
  %s1 = inlined_call_operand.hbm [shape: f32[8,6], index: 1, kind: input, shape index: {}]
  %s2 = inlined_call_operand.hbm [shape: f32[13,64], index: 2, kind: input, shape index: {}]
  %s3 = inlined_call_operand.vmem [shape: f32[1,64], index: 3, kind: input, shape index: {}]
  %s4 = inlined_call_operand.vmem [shape: f32[64,32], index: 4, kind: input, shape index: {}]
  %s5 = inlined_call_operand.hbm [shape: f32[1,32], index: 5, kind: input, shape index: {}]
  %s6 = inlined_call_operand.vmem [shape: f32[32,64], index: 6, kind: input, shape index: {}]
  %s7 = inlined_call_operand.hbm [shape: f32[1,64], index: 7, kind: input, shape index: {}]
  %s8 = inlined_call_operand.vmem [shape: f32[32,64], index: 8, kind: input, shape index: {}]
  %s9 = inlined_call_operand.vmem [shape: f32[32,32], index: 9, kind: input, shape index: {}]
  %s10 = inlined_call_operand.hbm [shape: f32[1,32], index: 10, kind: input, shape index: {}]
  %s11 = inlined_call_operand.vmem [shape: f32[32,32], index: 11, kind: input, shape index: {}]
  %s12 = inlined_call_operand.hbm [shape: f32[1,32], index: 12, kind: input, shape index: {}]
  %s13 = inlined_call_operand.vmem [shape: f32[32,1], index: 13, kind: input, shape index: {}]
  %s14 = inlined_call_operand.<no memory space> [shape: f32[1,1], index: 14, kind: input, shape index: {}]
  %s15 = inlined_call_operand.hbm [shape: f32[6,64], index: 15, kind: input, shape index: {}]
  %s16 = inlined_call_operand.vmem [shape: f32[32,64], index: 16, kind: input, shape index: {}]
  %s17 = inlined_call_operand.vmem [shape: f32[1,64], index: 17, kind: input, shape index: {}]
  %s18 = inlined_call_operand.vmem [shape: f32[64,32], index: 18, kind: input, shape index: {}]
  %s19 = inlined_call_operand.vmem [shape: f32[1,32], index: 19, kind: input, shape index: {}]
  %s20 = inlined_call_operand.vmem [shape: f32[1,32], index: 20, kind: input, shape index: {}]
  %s21 = inlined_call_operand.<no memory space> [shape: f32[1,1], index: 21, kind: input, shape index: {}]
  %s22 = inlined_call_operand.hbm [shape: f32[1,8], index: 22, kind: output, shape index: {}]
  %s23 = sld [smem:[#allocation0]]
  $region126: #{tpu_custom_call.1} parent=0
    _
  %s25 = ssub.s32 1, %s23
  %s26 = scalar_select 0, %s25, %s23
  %v27 = vstv %s14
  %28 = vst [vmem:[#allocation2] sm:$0x1] %v27
  %v29 = vstv %s21
  %30 = vst [vmem:[#allocation3] sm:$0x1] %v29
  $region1: #{tpu_custom_call.1} parent=0
    #allocation4 [shape = 'u8[4096]{0}', space=vmem, size = 0x1000, scoped, tag = 'input window, operand 1, single buffered']
    #allocation5 [shape = 's32[1]{0}', space=sflag, size = 0x4, scoped, tag = 'scoped memory for tpu_custom_call.1']
    #allocation6 [shape = 's32[1]{0}', space=sflag, size = 0x4, scoped, tag = 'scoped memory for tpu_custom_call.1']
    #allocation7 [shape = 'u8[8192]{0}', space=vmem, size = 0x2000, scoped, tag = 'input window, operand 2, single buffered']
    #allocation8 [shape = 's32[1]{0}', space=sflag, size = 0x4, scoped, tag = 'scoped memory for tpu_custom_call.1']
    #allocation9 [shape = 'u8[512]{0}', space=vmem, size = 0x400, scoped, tag = 'input window, operand 5, single buffered']
    #allocation10 [shape = 'u8[512]{0}', space=vmem, size = 0x400, scoped, tag = 'input window, operand 7, single buffered']
    #allocation11 [shape = 's32[1]{0}', space=sflag, size = 0x4, scoped, tag = 'scoped memory for tpu_custom_call.1']
    #allocation12 [shape = 'u8[512]{0}', space=vmem, size = 0x400, scoped, tag = 'input window, operand 10, single buffered']
    #allocation13 [shape = 'u8[512]{0}', space=vmem, size = 0x400, scoped, tag = 'input window, operand 12, single buffered']
    #allocation14 [shape = 's32[1]{0}', space=sflag, size = 0x4, scoped, tag = 'scoped memory for tpu_custom_call.1']
    #allocation15 [shape = 'u8[4096]{0}', space=vmem, size = 0x1000, scoped, tag = 'input window, operand 15, single buffered']
    #allocation16 [shape = 'u8[512]{0}', space=vmem, size = 0x400, scoped, tag = 'output window, operand 0, single buffered']
    %31 = vsyncpa [#allocation5], 0
    %32 = vsyncpa [#allocation8], 0
    %33 = vsyncpa [#allocation11], 0
    %34 = vsyncpa [#allocation14], 0
    %35 = vsyncpa [#allocation6], 0
    // Predicated region
    $region2: #{tpu_custom_call.1} parent=1 // pred_check
      _
    $region3: #{tpu_custom_call.1} parent=1 // pred_check_branch
      %37 = sbr.rel (0) target = $region5
    $region4: #{tpu_custom_call.1} parent=1 // pred_region
      _
    $region5: #{tpu_custom_call.1} parent=1 // pred_fallthru
      _
    // Predicated region
    $region6: #{tpu_custom_call.1} parent=1 // pred_check
      _
    $region7: #{tpu_custom_call.1} parent=1 // pred_check_branch
      %39 = sbr.rel (0) target = $region9
    $region8: #{tpu_custom_call.1} parent=1 // pred_region
      %s41 = ssub.s32 128, 128
      %42 = vsyncadd [#allocation5], %s41
      %s44 = sshll.u32 [#allocation4], 4
      %s45 = int_to_ptr.vmem [resolvable:$true] %s44
      %47 = dma.hbm_to_vmem [thread:$0]  %s1, 128, %s45, [#allocation5]
    $region9: #{tpu_custom_call.1} parent=1 // pred_fallthru
      _
    // Predicated region
    $region10: #{tpu_custom_call.1} parent=1 // pred_check
      _
    $region11: #{tpu_custom_call.1} parent=1 // pred_check_branch
      %49 = sbr.rel (0) target = $region13
    $region12: #{tpu_custom_call.1} parent=1 // pred_region
      %s51 = ssub.s32 256, 256
      %52 = vsyncadd [#allocation8], %s51
      %s53 = sshll.u32 [#allocation7], 4
      %s54 = int_to_ptr.vmem [resolvable:$true] %s53
      %59 = dma.hbm_to_vmem [thread:$0]  %s2, 256, %s54, [#allocation8], 128, 128, 8
    $region13: #{tpu_custom_call.1} parent=1 // pred_fallthru
      _
    // Predicated region
    $region14: #{tpu_custom_call.1} parent=1 // pred_check
      _
    $region15: #{tpu_custom_call.1} parent=1 // pred_check_branch
      %61 = sbr.rel (0) target = $region17
    $region16: #{tpu_custom_call.1} parent=1 // pred_region
      _
    $region17: #{tpu_custom_call.1} parent=1 // pred_fallthru
      _
    // Predicated region
    $region18: #{tpu_custom_call.1} parent=1 // pred_check
      _
    $region19: #{tpu_custom_call.1} parent=1 // pred_check_branch
      %63 = sbr.rel (0) target = $region21
    $region20: #{tpu_custom_call.1} parent=1 // pred_region
      _
    $region21: #{tpu_custom_call.1} parent=1 // pred_fallthru
      _
    // Predicated region
    $region22: #{tpu_custom_call.1} parent=1 // pred_check
      _
    $region23: #{tpu_custom_call.1} parent=1 // pred_check_branch
      %65 = sbr.rel (0) target = $region25
    $region24: #{tpu_custom_call.1} parent=1 // pred_region
      %s67 = ssub.s32 16, 16
      %68 = vsyncadd [#allocation8], %s67
      %s70 = sshll.u32 [#allocation9], 4
      %s71 = int_to_ptr.vmem [resolvable:$true] %s70
      %73 = dma.hbm_to_vmem [thread:$0]  %s5, 16, %s71, [#allocation8]
    $region25: #{tpu_custom_call.1} parent=1 // pred_fallthru
      _
    // Predicated region
    $region26: #{tpu_custom_call.1} parent=1 // pred_check
      _
    $region27: #{tpu_custom_call.1} parent=1 // pred_check_branch
      %75 = sbr.rel (0) target = $region29
    $region28: #{tpu_custom_call.1} parent=1 // pred_region
      _
    $region29: #{tpu_custom_call.1} parent=1 // pred_fallthru
      _
    // Predicated region
    $region30: #{tpu_custom_call.1} parent=1 // pred_check
      _
    $region31: #{tpu_custom_call.1} parent=1 // pred_check_branch
      %77 = sbr.rel (0) target = $region33
    $region32: #{tpu_custom_call.1} parent=1 // pred_region
      %s79 = ssub.s32 16, 16
      %80 = vsyncadd [#allocation11], %s79
      %s82 = sshll.u32 [#allocation10], 4
      %s83 = int_to_ptr.vmem [resolvable:$true] %s82
      %85 = dma.hbm_to_vmem [thread:$0]  %s7, 16, %s83, [#allocation11]
    $region33: #{tpu_custom_call.1} parent=1 // pred_fallthru
      _
    // Predicated region
    $region34: #{tpu_custom_call.1} parent=1 // pred_check
      _
    $region35: #{tpu_custom_call.1} parent=1 // pred_check_branch
      %87 = sbr.rel (0) target = $region37
    $region36: #{tpu_custom_call.1} parent=1 // pred_region
      _
    $region37: #{tpu_custom_call.1} parent=1 // pred_fallthru
      _
    // Predicated region
    $region38: #{tpu_custom_call.1} parent=1 // pred_check
      _
    $region39: #{tpu_custom_call.1} parent=1 // pred_check_branch
      %89 = sbr.rel (0) target = $region41
    $region40: #{tpu_custom_call.1} parent=1 // pred_region
      _
    $region41: #{tpu_custom_call.1} parent=1 // pred_fallthru
      _
    // Predicated region
    $region42: #{tpu_custom_call.1} parent=1 // pred_check
      _
    $region43: #{tpu_custom_call.1} parent=1 // pred_check_branch
      %91 = sbr.rel (0) target = $region45
    $region44: #{tpu_custom_call.1} parent=1 // pred_region
      %s93 = ssub.s32 16, 16
      %94 = vsyncadd [#allocation11], %s93
      %s96 = sshll.u32 [#allocation12], 4
      %s97 = int_to_ptr.vmem [resolvable:$true] %s96
      %99 = dma.hbm_to_vmem [thread:$0]  %s10, 16, %s97, [#allocation11]
    $region45: #{tpu_custom_call.1} parent=1 // pred_fallthru
      _
    // Predicated region
    $region46: #{tpu_custom_call.1} parent=1 // pred_check
      _
    $region47: #{tpu_custom_call.1} parent=1 // pred_check_branch
      %101 = sbr.rel (0) target = $region49
    $region48: #{tpu_custom_call.1} parent=1 // pred_region
      _
    $region49: #{tpu_custom_call.1} parent=1 // pred_fallthru
      _
    // Predicated region
    $region50: #{tpu_custom_call.1} parent=1 // pred_check
      _
    $region51: #{tpu_custom_call.1} parent=1 // pred_check_branch
      %103 = sbr.rel (0) target = $region53
    $region52: #{tpu_custom_call.1} parent=1 // pred_region
      %s105 = ssub.s32 16, 16
      %106 = vsyncadd [#allocation14], %s105
      %s108 = sshll.u32 [#allocation13], 4
      %s109 = int_to_ptr.vmem [resolvable:$true] %s108
      %111 = dma.hbm_to_vmem [thread:$0]  %s12, 16, %s109, [#allocation14]
    $region53: #{tpu_custom_call.1} parent=1 // pred_fallthru
      _
    // Predicated region
    $region54: #{tpu_custom_call.1} parent=1 // pred_check
      _
    $region55: #{tpu_custom_call.1} parent=1 // pred_check_branch
      %113 = sbr.rel (0) target = $region57
    $region56: #{tpu_custom_call.1} parent=1 // pred_region
      _
    $region57: #{tpu_custom_call.1} parent=1 // pred_fallthru
      _
    // Predicated region
    $region58: #{tpu_custom_call.1} parent=1 // pred_check
      _
    $region59: #{tpu_custom_call.1} parent=1 // pred_check_branch
      %115 = sbr.rel (0) target = $region61
    $region60: #{tpu_custom_call.1} parent=1 // pred_region
      _
    $region61: #{tpu_custom_call.1} parent=1 // pred_fallthru
      _
    // Predicated region
    $region62: #{tpu_custom_call.1} parent=1 // pred_check
      _
    $region63: #{tpu_custom_call.1} parent=1 // pred_check_branch
      %117 = sbr.rel (0) target = $region65
    $region64: #{tpu_custom_call.1} parent=1 // pred_region
      %s119 = ssub.s32 128, 128
      %120 = vsyncadd [#allocation14], %s119
      %s122 = sshll.u32 [#allocation15], 4
      %s123 = int_to_ptr.vmem [resolvable:$true] %s122
      %125 = dma.hbm_to_vmem [thread:$0]  %s15, 128, %s123, [#allocation14]
    $region65: #{tpu_custom_call.1} parent=1 // pred_fallthru
      _
    // Predicated region
    $region66: #{tpu_custom_call.1} parent=1 // pred_check
      _
    $region67: #{tpu_custom_call.1} parent=1 // pred_check_branch
      %127 = sbr.rel (0) target = $region69
    $region68: #{tpu_custom_call.1} parent=1 // pred_region
      _
    $region69: #{tpu_custom_call.1} parent=1 // pred_fallthru
      _
    // Predicated region
    $region70: #{tpu_custom_call.1} parent=1 // pred_check
      _
    $region71: #{tpu_custom_call.1} parent=1 // pred_check_branch
      %129 = sbr.rel (0) target = $region73
    $region72: #{tpu_custom_call.1} parent=1 // pred_region
      _
    $region73: #{tpu_custom_call.1} parent=1 // pred_fallthru
      _
    // Predicated region
    $region74: #{tpu_custom_call.1} parent=1 // pred_check
      _
    $region75: #{tpu_custom_call.1} parent=1 // pred_check_branch
      %131 = sbr.rel (0) target = $region77
    $region76: #{tpu_custom_call.1} parent=1 // pred_region
      _
    $region77: #{tpu_custom_call.1} parent=1 // pred_fallthru
      _
    // Predicated region
    $region78: #{tpu_custom_call.1} parent=1 // pred_check
      _
    $region79: #{tpu_custom_call.1} parent=1 // pred_check_branch
      %133 = sbr.rel (0) target = $region81
    $region80: #{tpu_custom_call.1} parent=1 // pred_region
      _
    $region81: #{tpu_custom_call.1} parent=1 // pred_fallthru
      _
    // Predicated region
    $region82: #{tpu_custom_call.1} parent=1 // pred_check
      _
    $region83: #{tpu_custom_call.1} parent=1 // pred_check_branch
      %135 = sbr.rel (0) target = $region85
    $region84: #{tpu_custom_call.1} parent=1 // pred_region
      _
    $region85: #{tpu_custom_call.1} parent=1 // pred_fallthru
      _
    // Predicated region
    $region86: #{tpu_custom_call.1} parent=1 // pred_check
      _
    $region87: #{tpu_custom_call.1} parent=1 // pred_check_branch
      %137 = sbr.rel (0) target = $region89
    $region88: #{tpu_custom_call.1} parent=1 // pred_region
      _
    $region89: #{tpu_custom_call.1} parent=1 // pred_fallthru
      _
    // Predicated region
    $region90: #{tpu_custom_call.1} parent=1 // pred_check
      _
    $region91: #{tpu_custom_call.1} parent=1 // pred_check_branch
      %139 = sbr.rel (0) target = $region93
    $region92: #{tpu_custom_call.1} parent=1 // pred_region
      %140 = dma.done [#allocation5], 128
    $region93: #{tpu_custom_call.1} parent=1 // pred_fallthru
      _
    // Predicated region
    $region94: #{tpu_custom_call.1} parent=1 // pred_check
      _
    $region95: #{tpu_custom_call.1} parent=1 // pred_check_branch
      %142 = sbr.rel (0) target = $region97
    $region96: #{tpu_custom_call.1} parent=1 // pred_region
      %143 = dma.done [#allocation8], 256
    $region97: #{tpu_custom_call.1} parent=1 // pred_fallthru
      _
    // Predicated region
    $region98: #{tpu_custom_call.1} parent=1 // pred_check
      _
    $region99: #{tpu_custom_call.1} parent=1 // pred_check_branch
      %145 = sbr.rel (0) target = $region101
    $region100: #{tpu_custom_call.1} parent=1 // pred_region
      %146 = dma.done [#allocation8], 16
    $region101: #{tpu_custom_call.1} parent=1 // pred_fallthru
      _
    // Predicated region
    $region102: #{tpu_custom_call.1} parent=1 // pred_check
      _
    $region103: #{tpu_custom_call.1} parent=1 // pred_check_branch
      %148 = sbr.rel (0) target = $region105
    $region104: #{tpu_custom_call.1} parent=1 // pred_region
      %149 = dma.done [#allocation11], 16
    $region105: #{tpu_custom_call.1} parent=1 // pred_fallthru
      _
    // Predicated region
    $region106: #{tpu_custom_call.1} parent=1 // pred_check
      _
    $region107: #{tpu_custom_call.1} parent=1 // pred_check_branch
      %151 = sbr.rel (0) target = $region109
    $region108: #{tpu_custom_call.1} parent=1 // pred_region
      %152 = dma.done [#allocation11], 16
    $region109: #{tpu_custom_call.1} parent=1 // pred_fallthru
      _
    // Predicated region
    $region110: #{tpu_custom_call.1} parent=1 // pred_check
      _
    $region111: #{tpu_custom_call.1} parent=1 // pred_check_branch
      %154 = sbr.rel (0) target = $region113
    $region112: #{tpu_custom_call.1} parent=1 // pred_region
      %155 = dma.done [#allocation14], 16
    $region113: #{tpu_custom_call.1} parent=1 // pred_fallthru
      _
    // Predicated region
    $region114: #{tpu_custom_call.1} parent=1 // pred_check
      _
    $region115: #{tpu_custom_call.1} parent=1 // pred_check_branch
      %157 = sbr.rel (0) target = $region117
    $region116: #{tpu_custom_call.1} parent=1 // pred_region
      %158 = dma.done [#allocation14], 128
    $region117: #{tpu_custom_call.1} parent=1 // pred_fallthru
      _
    %v159 = vld [vmem:[%s0] sm:$0xff]
    %v160 = vld [vmem:[%s0 + $0x8] sm:$0xff]
    %v161 = vld [vmem:[%s0 + $0x10] sm:$0xff]
    %v162 = vld [vmem:[%s0 + $0x18] sm:$0xff]
    %v163 = vld [vmem:[%s0 + $0x20] sm:$0xff]
    %v164 = vld [vmem:[%s0 + $0x28] sm:$0xff]
    %v165 = vld [vmem:[%s0 + $0x30] sm:$0xff]
    %v166 = vld [vmem:[%s0 + $0x38] sm:$0xff]
    %v167 = vld [vmem:[#allocation7] sm:$0xff]
    %v168 = vld [vmem:[#allocation7 + $0x8] sm:$0x1f]
    %v169 = vld [vmem:[%s3] sm:$0x1]
    %v171 = vlaneseq
    %v172 = vshrl.u32 %v171, 7
    %v173 = vsub.s32 0, %v172
    %v174 = vrot.slane %v169, %v173
    %vm176 = vcmask 105472
    %v178 = vsel %vm176, %v159, 0
    %v181 = vsel %vm176, %v160, 0
    %v184 = vsel %vm176, %v161, 0
    %v187 = vsel %vm176, %v162, 0
    %v190 = vsel %vm176, %v163, 0
    %v193 = vsel %vm176, %v164, 0
    %v196 = vsel %vm176, %v165, 0
    %v199 = vsel %vm176, %v166, 0
    %vm201 = vcmask 1044480
    %v203 = vsel %vm201, %v168, 0
    %205 = vmatprep.subr.mxu0 0.0
    %206 = vmatpush1.msra.mxu0 %v167
    %207 = vmatprep.subr.mxu0 0.0
    %208 = vmatpush1.msra.mxu0 %v203
    %209 = vmatprep.subr.mxu0 0.0
    %210 = vmatpush1.msra.mxu0 0.0
    %211 = vmatprep.subr.mxu0 0.0
    %212 = vmatpush1.msra.mxu0 0.0
    %213 = vmatprep.subr.mxu0 0.0
    %214 = vmatpush1.msra.mxu0 0.0
    %215 = vmatprep.subr.mxu0 0.0
    %216 = vmatpush1.msra.mxu0 0.0
    %217 = vmatprep.subr.mxu0 0.0
    %218 = vmatpush1.msra.mxu0 0.0
    %219 = vmatprep.subr.mxu0 0.0
    %220 = vmatpush1.msra.mxu0 0.0
    %221 = vmatprep.subr.mxu0 0.0
    %222 = vmatpush1.msra.mxu0 0.0
    %223 = vmatprep.subr.mxu0 0.0
    %224 = vmatpush1.msra.mxu0 0.0
    %225 = vmatprep.subr.mxu0 0.0
    %226 = vmatpush1.msra.mxu0 0.0
    %227 = vmatprep.subr.mxu0 0.0
    %228 = vmatpush1.msra.mxu0 0.0
    %229 = vmatprep.subr.mxu0 0.0
    %230 = vmatpush1.msra.mxu0 0.0
    %231 = vmatprep.subr.mxu0 0.0
    %232 = vmatpush1.msra.mxu0 0.0
    %233 = vmatprep.subr.mxu0 0.0
    %234 = vmatpush1.msra.mxu0 0.0
    %235 = vmatprep.subr.mxu0 0.0
    %236 = vmatpush1.msra.mxu0 0.0
    %237 = vmatprep.subr.mxu0 0.0
    %238 = vmatpush1.msra.mxu0 0.0
    %239 = vmatprep.subr.mxu0 0.0
    %240 = vmatpush1.msra.mxu0 0.0
    %241 = vmatprep.subr.mxu0 0.0
    %242 = vmatpush1.msra.mxu0 0.0
    %243 = vmatprep.subr.mxu0 0.0
    %244 = vmatpush1.msra.mxu0 0.0
    %245 = vmatprep.subr.mxu0 0.0
    %246 = vmatpush1.msra.mxu0 0.0
    %247 = vmatprep.subr.mxu0 0.0
    %248 = vmatpush1.msra.mxu0 0.0
    %249 = vmatprep.subr.mxu0 0.0
    %250 = vmatpush1.msra.mxu0 0.0
    %251 = vmatprep.subr.mxu0 0.0
    %252 = vmatpush1.msra.mxu0 0.0
    %253 = vmatprep.subr.mxu0 0.0
    %254 = vmatpush1.msra.mxu0 0.0
    %255 = vmatprep.subr.mxu0 0.0
    %256 = vmatpush1.msra.mxu0 0.0
    %257 = vmatprep.subr.mxu0 0.0
    %258 = vmatpush1.msra.mxu0 0.0
    %259 = vmatprep.subr.mxu0 0.0
    %260 = vmatpush1.msra.mxu0 0.0
    %261 = vmatprep.subr.mxu0 0.0
    %262 = vmatpush1.msra.mxu0 0.0
    %263 = vmatprep.subr.mxu0 0.0
    %264 = vmatpush1.msra.mxu0 0.0
    %265 = vmatprep.subr.mxu0 0.0
    %266 = vmatpush1.msra.mxu0 0.0
    %267 = vmatprep.subr.mxu0 0.0
    %268 = vmatpush1.msra.mxu0 0.0
    %269 = vmatprep.mubr.f32.mxu0 0.0
    %270 = vmatmul.mubr.f32.gmra.mrb[0].mxu0 %v178
    %v271 = vpop.f32.mrb[0].mxu0
    %v272 = vadd.f32 %v174, %v271
    %v273 = vpop.f32.mrb[0].mxu0
    %274 = vmatprep.mubr.f32.mxu0 0.0
    %275 = vmatmul.mubr.f32.gmra.mrb[0].mxu0 %v181
    %v276 = vpop.f32.mrb[0].mxu0
    %v277 = vadd.f32 %v174, %v276
    %v278 = vpop.f32.mrb[0].mxu0
    %279 = vmatprep.mubr.f32.mxu0 0.0
    %280 = vmatmul.mubr.f32.gmra.mrb[0].mxu0 %v184
    %v281 = vpop.f32.mrb[0].mxu0
    %v282 = vadd.f32 %v174, %v281
    %v283 = vpop.f32.mrb[0].mxu0
    %284 = vmatprep.mubr.f32.mxu0 0.0
    %285 = vmatmul.mubr.f32.gmra.mrb[0].mxu0 %v187
    %v286 = vpop.f32.mrb[0].mxu0
    %v287 = vadd.f32 %v174, %v286
    %v288 = vpop.f32.mrb[0].mxu0
    %289 = vmatprep.mubr.f32.mxu0 0.0
    %290 = vmatmul.mubr.f32.gmra.mrb[0].mxu0 %v190
    %v291 = vpop.f32.mrb[0].mxu0
    %v292 = vadd.f32 %v174, %v291
    %v293 = vpop.f32.mrb[0].mxu0
    %294 = vmatprep.mubr.f32.mxu0 0.0
    %295 = vmatmul.mubr.f32.gmra.mrb[0].mxu0 %v193
    %v296 = vpop.f32.mrb[0].mxu0
    %v297 = vadd.f32 %v174, %v296
    %v298 = vpop.f32.mrb[0].mxu0
    %299 = vmatprep.mubr.f32.mxu0 0.0
    %300 = vmatmul.mubr.f32.gmra.mrb[0].mxu0 %v196
    %v301 = vpop.f32.mrb[0].mxu0
    %v302 = vadd.f32 %v174, %v301
    %v303 = vpop.f32.mrb[0].mxu0
    %304 = vmatprep.mubr.f32.mxu0 0.0
    %305 = vmatmul.mubr.f32.gmra.mrb[0].mxu0 %v199
    %v306 = vpop.f32.mrb[0].mxu0
    %v307 = vadd.f32 %v174, %v306
    %v308 = vpop.f32.mrb[0].mxu0
    %309 = vdwg.mxu0
    %v310 = vmax.f32 %v272, 0.0
    %v311 = vmax.f32 %v277, 0.0
    %v312 = vmax.f32 %v282, 0.0
    %v313 = vmax.f32 %v287, 0.0
    %v314 = vmax.f32 %v292, 0.0
    %v315 = vmax.f32 %v297, 0.0
    %v316 = vmax.f32 %v302, 0.0
    %v317 = vmax.f32 %v307, 0.0
    %v318 = vld [vmem:[%s4] sm:$0xff]
    %v319 = vld [vmem:[%s4 + $0x8] sm:$0xff]
    %v320 = vld [vmem:[%s4 + $0x10] sm:$0xff]
    %v321 = vld [vmem:[%s4 + $0x18] sm:$0xff]
    %v322 = vld [vmem:[%s4 + $0x20] sm:$0xff]
    %v323 = vld [vmem:[%s4 + $0x28] sm:$0xff]
    %v324 = vld [vmem:[%s4 + $0x30] sm:$0xff]
    %v325 = vld [vmem:[%s4 + $0x38] sm:$0xff]
    %v326 = vld [vmem:[#allocation9] sm:$0x1]
    %v328 = vlaneseq
    %v329 = vshrl.u32 %v328, 7
    %v330 = vsub.s32 0, %v329
    %v331 = vrot.slane %v326, %v330
    %vm333 = vcmask 523264
    %v335 = vsel %vm333, %v310, 0
    %v338 = vsel %vm333, %v311, 0
    %v341 = vsel %vm333, %v312, 0
    %v344 = vsel %vm333, %v313, 0
    %v347 = vsel %vm333, %v314, 0
    %v350 = vsel %vm333, %v315, 0
    %v353 = vsel %vm333, %v316, 0
    %v356 = vsel %vm333, %v317, 0
    %358 = vmatprep.subr.mxu0 0.0
    %359 = vmatpush1.msra.mxu0 %v318
    %360 = vmatprep.subr.mxu0 0.0
    %361 = vmatpush1.msra.mxu0 %v319
    %362 = vmatprep.subr.mxu0 0.0
    %363 = vmatpush1.msra.mxu0 %v320
    %364 = vmatprep.subr.mxu0 0.0
    %365 = vmatpush1.msra.mxu0 %v321
    %366 = vmatprep.subr.mxu0 0.0
    %367 = vmatpush1.msra.mxu0 %v322
    %368 = vmatprep.subr.mxu0 0.0
    %369 = vmatpush1.msra.mxu0 %v323
    %370 = vmatprep.subr.mxu0 0.0
    %371 = vmatpush1.msra.mxu0 %v324
    %372 = vmatprep.subr.mxu0 0.0
    %373 = vmatpush1.msra.mxu0 %v325
    %374 = vmatprep.subr.mxu0 0.0
    %375 = vmatpush1.msra.mxu0 0.0
    %376 = vmatprep.subr.mxu0 0.0
    %377 = vmatpush1.msra.mxu0 0.0
    %378 = vmatprep.subr.mxu0 0.0
    %379 = vmatpush1.msra.mxu0 0.0
    %380 = vmatprep.subr.mxu0 0.0
    %381 = vmatpush1.msra.mxu0 0.0
    %382 = vmatprep.subr.mxu0 0.0
    %383 = vmatpush1.msra.mxu0 0.0
    %384 = vmatprep.subr.mxu0 0.0
    %385 = vmatpush1.msra.mxu0 0.0
    %386 = vmatprep.subr.mxu0 0.0
    %387 = vmatpush1.msra.mxu0 0.0
    %388 = vmatprep.subr.mxu0 0.0
    %389 = vmatpush1.msra.mxu0 0.0
    %390 = vmatprep.subr.mxu0 0.0
    %391 = vmatpush1.msra.mxu0 0.0
    %392 = vmatprep.subr.mxu0 0.0
    %393 = vmatpush1.msra.mxu0 0.0
    %394 = vmatprep.subr.mxu0 0.0
    %395 = vmatpush1.msra.mxu0 0.0
    %396 = vmatprep.subr.mxu0 0.0
    %397 = vmatpush1.msra.mxu0 0.0
    %398 = vmatprep.subr.mxu0 0.0
    %399 = vmatpush1.msra.mxu0 0.0
    %400 = vmatprep.subr.mxu0 0.0
    %401 = vmatpush1.msra.mxu0 0.0
    %402 = vmatprep.subr.mxu0 0.0
    %403 = vmatpush1.msra.mxu0 0.0
    %404 = vmatprep.subr.mxu0 0.0
    %405 = vmatpush1.msra.mxu0 0.0
    %406 = vmatprep.subr.mxu0 0.0
    %407 = vmatpush1.msra.mxu0 0.0
    %408 = vmatprep.subr.mxu0 0.0
    %409 = vmatpush1.msra.mxu0 0.0
    %410 = vmatprep.subr.mxu0 0.0
    %411 = vmatpush1.msra.mxu0 0.0
    %412 = vmatprep.subr.mxu0 0.0
    %413 = vmatpush1.msra.mxu0 0.0
    %414 = vmatprep.subr.mxu0 0.0
    %415 = vmatpush1.msra.mxu0 0.0
    %416 = vmatprep.subr.mxu0 0.0
    %417 = vmatpush1.msra.mxu0 0.0
    %418 = vmatprep.subr.mxu0 0.0
    %419 = vmatpush1.msra.mxu0 0.0
    %420 = vmatprep.subr.mxu0 0.0
    %421 = vmatpush1.msra.mxu0 0.0
    %422 = vmatprep.mubr.f32.mxu0 0.0
    %423 = vmatmul.mubr.f32.gmra.mrb[0].mxu0 %v335
    %v424 = vpop.f32.mrb[0].mxu0
    %v425 = vadd.f32 %v331, %v424
    %v426 = vpop.f32.mrb[0].mxu0
    %427 = vmatprep.mubr.f32.mxu0 0.0
    %428 = vmatmul.mubr.f32.gmra.mrb[0].mxu0 %v338
    %v429 = vpop.f32.mrb[0].mxu0
    %v430 = vadd.f32 %v331, %v429
    %v431 = vpop.f32.mrb[0].mxu0
    %432 = vmatprep.mubr.f32.mxu0 0.0
    %433 = vmatmul.mubr.f32.gmra.mrb[0].mxu0 %v341
    %v434 = vpop.f32.mrb[0].mxu0
    %v435 = vadd.f32 %v331, %v434
    %v436 = vpop.f32.mrb[0].mxu0
    %437 = vmatprep.mubr.f32.mxu0 0.0
    %438 = vmatmul.mubr.f32.gmra.mrb[0].mxu0 %v344
    %v439 = vpop.f32.mrb[0].mxu0
    %v440 = vadd.f32 %v331, %v439
    %v441 = vpop.f32.mrb[0].mxu0
    %442 = vmatprep.mubr.f32.mxu0 0.0
    %443 = vmatmul.mubr.f32.gmra.mrb[0].mxu0 %v347
    %v444 = vpop.f32.mrb[0].mxu0
    %v445 = vadd.f32 %v331, %v444
    %v446 = vpop.f32.mrb[0].mxu0
    %447 = vmatprep.mubr.f32.mxu0 0.0
    %448 = vmatmul.mubr.f32.gmra.mrb[0].mxu0 %v350
    %v449 = vpop.f32.mrb[0].mxu0
    %v450 = vadd.f32 %v331, %v449
    %v451 = vpop.f32.mrb[0].mxu0
    %452 = vmatprep.mubr.f32.mxu0 0.0
    %453 = vmatmul.mubr.f32.gmra.mrb[0].mxu0 %v353
    %v454 = vpop.f32.mrb[0].mxu0
    %v455 = vadd.f32 %v331, %v454
    %v456 = vpop.f32.mrb[0].mxu0
    %457 = vmatprep.mubr.f32.mxu0 0.0
    %458 = vmatmul.mubr.f32.gmra.mrb[0].mxu0 %v356
    %v459 = vpop.f32.mrb[0].mxu0
    %v460 = vadd.f32 %v331, %v459
    %v461 = vpop.f32.mrb[0].mxu0
    %462 = vdwg.mxu0
    %v463 = vmax.f32 %v425, 0.0
    %v464 = vmax.f32 %v430, 0.0
    %v465 = vmax.f32 %v435, 0.0
    %v466 = vmax.f32 %v440, 0.0
    %v467 = vmax.f32 %v445, 0.0
    %v468 = vmax.f32 %v450, 0.0
    %v469 = vmax.f32 %v455, 0.0
    %v470 = vmax.f32 %v460, 0.0
    %vm471 = vcmask 261120
    %v472 = vsel %vm471, %v463, 0.0
    %v473 = vrot.slane %v472, 4
    %v474 = vadd.f32 %v472, %v473
    %v475 = vrot.slane %v474, 2
    %v476 = vadd.f32 %v474, %v475
    %v477 = vrot.slane %v476, 1
    %v478 = vadd.f32 %v476, %v477
    %v479 = vsel %vm471, %v464, 0.0
    %v480 = vrot.slane %v479, 4
    %v481 = vadd.f32 %v479, %v480
    %v482 = vrot.slane %v481, 2
    %v483 = vadd.f32 %v481, %v482
    %v484 = vrot.slane %v483, 1
    %v485 = vadd.f32 %v483, %v484
    %v486 = vsel %vm471, %v465, 0.0
    %v487 = vrot.slane %v486, 4
    %v488 = vadd.f32 %v486, %v487
    %v489 = vrot.slane %v488, 2
    %v490 = vadd.f32 %v488, %v489
    %v491 = vrot.slane %v490, 1
    %v492 = vadd.f32 %v490, %v491
    %v493 = vsel %vm471, %v466, 0.0
    %v494 = vrot.slane %v493, 4
    %v495 = vadd.f32 %v493, %v494
    %v496 = vrot.slane %v495, 2
    %v497 = vadd.f32 %v495, %v496
    %v498 = vrot.slane %v497, 1
    %v499 = vadd.f32 %v497, %v498
    %v500 = vsel %vm471, %v467, 0.0
    %v501 = vrot.slane %v500, 4
    %v502 = vadd.f32 %v500, %v501
    %v503 = vrot.slane %v502, 2
    %v504 = vadd.f32 %v502, %v503
    %v505 = vrot.slane %v504, 1
    %v506 = vadd.f32 %v504, %v505
    %v507 = vsel %vm471, %v468, 0.0
    %v508 = vrot.slane %v507, 4
    %v509 = vadd.f32 %v507, %v508
    %v510 = vrot.slane %v509, 2
    %v511 = vadd.f32 %v509, %v510
    %v512 = vrot.slane %v511, 1
    %v513 = vadd.f32 %v511, %v512
    %v514 = vsel %vm471, %v469, 0.0
    %v515 = vrot.slane %v514, 4
    %v516 = vadd.f32 %v514, %v515
    %v517 = vrot.slane %v516, 2
    %v518 = vadd.f32 %v516, %v517
    %v519 = vrot.slane %v518, 1
    %v520 = vadd.f32 %v518, %v519
    %v521 = vsel %vm471, %v470, 0.0
    %v522 = vrot.slane %v521, 4
    %v523 = vadd.f32 %v521, %v522
    %v524 = vrot.slane %v523, 2
    %v525 = vadd.f32 %v523, %v524
    %v526 = vrot.slane %v525, 1
    %v527 = vadd.f32 %v525, %v526
    %v528 = vrcp.pop 8.0
    %v529 = vmul.f32 %v478, %v528
    %v530 = vmul.f32 %v485, %v528
    %v531 = vmul.f32 %v492, %v528
    %v532 = vmul.f32 %v499, %v528
    %v533 = vmul.f32 %v506, %v528
    %v534 = vmul.f32 %v513, %v528
    %v535 = vmul.f32 %v520, %v528
    %v536 = vmul.f32 %v527, %v528
    %v537 = vld [vmem:[%s6] sm:$0xff]
    %v538 = vld [vmem:[%s6 + $0x8] sm:$0xff]
    %v539 = vld [vmem:[%s6 + $0x10] sm:$0xff]
    %v540 = vld [vmem:[%s6 + $0x18] sm:$0xff]
    %v541 = vld [vmem:[#allocation10] sm:$0x1]
    %v543 = vlaneseq
    %v544 = vshrl.u32 %v543, 7
    %v545 = vsub.s32 0, %v544
    %v546 = vrot.slane %v541, %v545
    %v549 = vsel %vm471, %v463, 0
    %v552 = vsel %vm471, %v464, 0
    %v555 = vsel %vm471, %v465, 0
    %v558 = vsel %vm471, %v466, 0
    %v561 = vsel %vm471, %v467, 0
    %v564 = vsel %vm471, %v468, 0
    %v567 = vsel %vm471, %v469, 0
    %v570 = vsel %vm471, %v470, 0
    %572 = vmatprep.subr.mxu0 0.0
    %573 = vmatpush1.msra.mxu0 %v537
    %574 = vmatprep.subr.mxu0 0.0
    %575 = vmatpush1.msra.mxu0 %v538
    %576 = vmatprep.subr.mxu0 0.0
    %577 = vmatpush1.msra.mxu0 %v539
    %578 = vmatprep.subr.mxu0 0.0
    %579 = vmatpush1.msra.mxu0 %v540
    %580 = vmatprep.subr.mxu0 0.0
    %581 = vmatpush1.msra.mxu0 0.0
    %582 = vmatprep.subr.mxu0 0.0
    %583 = vmatpush1.msra.mxu0 0.0
    %584 = vmatprep.subr.mxu0 0.0
    %585 = vmatpush1.msra.mxu0 0.0
    %586 = vmatprep.subr.mxu0 0.0
    %587 = vmatpush1.msra.mxu0 0.0
    %588 = vmatprep.subr.mxu0 0.0
    %589 = vmatpush1.msra.mxu0 0.0
    %590 = vmatprep.subr.mxu0 0.0
    %591 = vmatpush1.msra.mxu0 0.0
    %592 = vmatprep.subr.mxu0 0.0
    %593 = vmatpush1.msra.mxu0 0.0
    %594 = vmatprep.subr.mxu0 0.0
    %595 = vmatpush1.msra.mxu0 0.0
    %596 = vmatprep.subr.mxu0 0.0
    %597 = vmatpush1.msra.mxu0 0.0
    %598 = vmatprep.subr.mxu0 0.0
    %599 = vmatpush1.msra.mxu0 0.0
    %600 = vmatprep.subr.mxu0 0.0
    %601 = vmatpush1.msra.mxu0 0.0
    %602 = vmatprep.subr.mxu0 0.0
    %603 = vmatpush1.msra.mxu0 0.0
    %604 = vmatprep.subr.mxu0 0.0
    %605 = vmatpush1.msra.mxu0 0.0
    %606 = vmatprep.subr.mxu0 0.0
    %607 = vmatpush1.msra.mxu0 0.0
    %608 = vmatprep.subr.mxu0 0.0
    %609 = vmatpush1.msra.mxu0 0.0
    %610 = vmatprep.subr.mxu0 0.0
    %611 = vmatpush1.msra.mxu0 0.0
    %612 = vmatprep.subr.mxu0 0.0
    %613 = vmatpush1.msra.mxu0 0.0
    %614 = vmatprep.subr.mxu0 0.0
    %615 = vmatpush1.msra.mxu0 0.0
    %616 = vmatprep.subr.mxu0 0.0
    %617 = vmatpush1.msra.mxu0 0.0
    %618 = vmatprep.subr.mxu0 0.0
    %619 = vmatpush1.msra.mxu0 0.0
    %620 = vmatprep.subr.mxu0 0.0
    %621 = vmatpush1.msra.mxu0 0.0
    %622 = vmatprep.subr.mxu0 0.0
    %623 = vmatpush1.msra.mxu0 0.0
    %624 = vmatprep.subr.mxu0 0.0
    %625 = vmatpush1.msra.mxu0 0.0
    %626 = vmatprep.subr.mxu0 0.0
    %627 = vmatpush1.msra.mxu0 0.0
    %628 = vmatprep.subr.mxu0 0.0
    %629 = vmatpush1.msra.mxu0 0.0
    %630 = vmatprep.subr.mxu0 0.0
    %631 = vmatpush1.msra.mxu0 0.0
    %632 = vmatprep.subr.mxu0 0.0
    %633 = vmatpush1.msra.mxu0 0.0
    %634 = vmatprep.subr.mxu0 0.0
    %635 = vmatpush1.msra.mxu0 0.0
    %636 = vmatprep.mubr.f32.mxu0 0.0
    %637 = vmatmul.mubr.f32.gmra.mrb[0].mxu0 %v549
    %v638 = vpop.f32.mrb[0].mxu0
    %v639 = vadd.f32 %v546, %v638
    %v640 = vpop.f32.mrb[0].mxu0
    %641 = vmatprep.mubr.f32.mxu0 0.0
    %642 = vmatmul.mubr.f32.gmra.mrb[0].mxu0 %v552
    %v643 = vpop.f32.mrb[0].mxu0
    %v644 = vadd.f32 %v546, %v643
    %v645 = vpop.f32.mrb[0].mxu0
    %646 = vmatprep.mubr.f32.mxu0 0.0
    %647 = vmatmul.mubr.f32.gmra.mrb[0].mxu0 %v555
    %v648 = vpop.f32.mrb[0].mxu0
    %v649 = vadd.f32 %v546, %v648
    %v650 = vpop.f32.mrb[0].mxu0
    %651 = vmatprep.mubr.f32.mxu0 0.0
    %652 = vmatmul.mubr.f32.gmra.mrb[0].mxu0 %v558
    %v653 = vpop.f32.mrb[0].mxu0
    %v654 = vadd.f32 %v546, %v653
    %v655 = vpop.f32.mrb[0].mxu0
    %656 = vmatprep.mubr.f32.mxu0 0.0
    %657 = vmatmul.mubr.f32.gmra.mrb[0].mxu0 %v561
    %v658 = vpop.f32.mrb[0].mxu0
    %v659 = vadd.f32 %v546, %v658
    %v660 = vpop.f32.mrb[0].mxu0
    %661 = vmatprep.mubr.f32.mxu0 0.0
    %662 = vmatmul.mubr.f32.gmra.mrb[0].mxu0 %v564
    %v663 = vpop.f32.mrb[0].mxu0
    %v664 = vadd.f32 %v546, %v663
    %v665 = vpop.f32.mrb[0].mxu0
    %666 = vmatprep.mubr.f32.mxu0 0.0
    %667 = vmatmul.mubr.f32.gmra.mrb[0].mxu0 %v567
    %v668 = vpop.f32.mrb[0].mxu0
    %v669 = vadd.f32 %v546, %v668
    %v670 = vpop.f32.mrb[0].mxu0
    %671 = vmatprep.mubr.f32.mxu0 0.0
    %672 = vmatmul.mubr.f32.gmra.mrb[0].mxu0 %v570
    %v673 = vpop.f32.mrb[0].mxu0
    %v674 = vadd.f32 %v546, %v673
    %v675 = vpop.f32.mrb[0].mxu0
    %676 = vdwg.mxu0
    %v677 = vld [vmem:[%s8] sm:$0xff]
    %v678 = vld [vmem:[%s8 + $0x8] sm:$0xff]
    %v679 = vld [vmem:[%s8 + $0x10] sm:$0xff]
    %v680 = vld [vmem:[%s8 + $0x18] sm:$0xff]
    %vm689 = vcmask 1041409
    %v690 = vsel %vm689, %v530, %v529
    %vm691 = vcmask 1042434
    %v692 = vsel %vm691, %v531, %v690
    %vm693 = vcmask 1043459
    %v694 = vsel %vm693, %v532, %v692
    %vm695 = vcmask 1044484
    %v696 = vsel %vm695, %v533, %v694
    %vm697 = vcmask 1045509
    %v698 = vsel %vm697, %v534, %v696
    %vm699 = vcmask 1046534
    %v700 = vsel %vm699, %v535, %v698
    %vm701 = vcmask 1047559
    %v702 = vsel %vm701, %v536, %v700
    %v703 = vsel %vm471, %v702, 0
    %705 = vmatprep.subr.mxu0 0.0
    %706 = vmatpush1.msra.mxu0 %v677
    %707 = vmatprep.subr.mxu0 0.0
    %708 = vmatpush1.msra.mxu0 %v678
    %709 = vmatprep.subr.mxu0 0.0
    %710 = vmatpush1.msra.mxu0 %v679
    %711 = vmatprep.subr.mxu0 0.0
    %712 = vmatpush1.msra.mxu0 %v680
    %713 = vmatprep.subr.mxu0 0.0
    %714 = vmatpush1.msra.mxu0 0.0
    %715 = vmatprep.subr.mxu0 0.0
    %716 = vmatpush1.msra.mxu0 0.0
    %717 = vmatprep.subr.mxu0 0.0
    %718 = vmatpush1.msra.mxu0 0.0
    %719 = vmatprep.subr.mxu0 0.0
    %720 = vmatpush1.msra.mxu0 0.0
    %721 = vmatprep.subr.mxu0 0.0
    %722 = vmatpush1.msra.mxu0 0.0
    %723 = vmatprep.subr.mxu0 0.0
    %724 = vmatpush1.msra.mxu0 0.0
    %725 = vmatprep.subr.mxu0 0.0
    %726 = vmatpush1.msra.mxu0 0.0
    %727 = vmatprep.subr.mxu0 0.0
    %728 = vmatpush1.msra.mxu0 0.0
    %729 = vmatprep.subr.mxu0 0.0
    %730 = vmatpush1.msra.mxu0 0.0
    %731 = vmatprep.subr.mxu0 0.0
    %732 = vmatpush1.msra.mxu0 0.0
    %733 = vmatprep.subr.mxu0 0.0
    %734 = vmatpush1.msra.mxu0 0.0
    %735 = vmatprep.subr.mxu0 0.0
    %736 = vmatpush1.msra.mxu0 0.0
    %737 = vmatprep.subr.mxu0 0.0
    %738 = vmatpush1.msra.mxu0 0.0
    %739 = vmatprep.subr.mxu0 0.0
    %740 = vmatpush1.msra.mxu0 0.0
    %741 = vmatprep.subr.mxu0 0.0
    %742 = vmatpush1.msra.mxu0 0.0
    %743 = vmatprep.subr.mxu0 0.0
    %744 = vmatpush1.msra.mxu0 0.0
    %745 = vmatprep.subr.mxu0 0.0
    %746 = vmatpush1.msra.mxu0 0.0
    %747 = vmatprep.subr.mxu0 0.0
    %748 = vmatpush1.msra.mxu0 0.0
    %749 = vmatprep.subr.mxu0 0.0
    %750 = vmatpush1.msra.mxu0 0.0
    %751 = vmatprep.subr.mxu0 0.0
    %752 = vmatpush1.msra.mxu0 0.0
    %753 = vmatprep.subr.mxu0 0.0
    %754 = vmatpush1.msra.mxu0 0.0
    %755 = vmatprep.subr.mxu0 0.0
    %756 = vmatpush1.msra.mxu0 0.0
    %757 = vmatprep.subr.mxu0 0.0
    %758 = vmatpush1.msra.mxu0 0.0
    %759 = vmatprep.subr.mxu0 0.0
    %760 = vmatpush1.msra.mxu0 0.0
    %761 = vmatprep.subr.mxu0 0.0
    %762 = vmatpush1.msra.mxu0 0.0
    %763 = vmatprep.subr.mxu0 0.0
    %764 = vmatpush1.msra.mxu0 0.0
    %765 = vmatprep.subr.mxu0 0.0
    %766 = vmatpush1.msra.mxu0 0.0
    %767 = vmatprep.subr.mxu0 0.0
    %768 = vmatpush1.msra.mxu0 0.0
    %769 = vmatprep.mubr.f32.mxu0 0.0
    %770 = vmatmul.mubr.f32.gmra.mrb[0].mxu0 %v703
    %v771 = vpop.f32.mrb[0].mxu0
    %v772 = vadd.f32 0.0, %v771
    %v773 = vpop.f32.mrb[0].mxu0
    %774 = vdwg.mxu0
    %v776 = vcombine.high %v772, %v772
    %v778 = vunpack.c.l.s4 1966171168
    %v779 = vunpack.c.0.s8 %v778
    %v780 = vlaneseq
    %v781 = vshrl.u32 %v780, 7
    %v782 = vsub.s32 %v779, %v781
    %v783 = vrot.slane %v772, %v782
    %v785 = vunpack.c.l.s4 1966171168
    %v786 = vunpack.c.0.s8 %v785
    %v787 = vlaneseq
    %v788 = vshrl.u32 %v787, 7
    %v789 = vsub.s32 %v786, %v788
    %v790 = vrot.slane %v776, %v789
    %v791 = vcombine.high %v783, %v783
    %v792 = vcombine.high %v790, %v790
    %v794 = vunpack.c.l.s4 1966171168
    %v795 = vunpack.c.0.s8 %v794
    %v796 = vlaneseq
    %v797 = vshrl.u32 %v796, 7
    %v798 = vsub.s32 %v795, %v797
    %v799 = vrot.slane %v783, %v798
    %v801 = vunpack.c.l.s4 1966171168
    %v802 = vunpack.c.0.s8 %v801
    %v803 = vlaneseq
    %v804 = vshrl.u32 %v803, 7
    %v805 = vsub.s32 %v802, %v804
    %v806 = vrot.slane %v790, %v805
    %v808 = vunpack.c.l.s4 1966171168
    %v809 = vunpack.c.0.s8 %v808
    %v810 = vlaneseq
    %v811 = vshrl.u32 %v810, 7
    %v812 = vsub.s32 %v809, %v811
    %v813 = vrot.slane %v791, %v812
    %v815 = vunpack.c.l.s4 1966171168
    %v816 = vunpack.c.0.s8 %v815
    %v817 = vlaneseq
    %v818 = vshrl.u32 %v817, 7
    %v819 = vsub.s32 %v816, %v818
    %v820 = vrot.slane %v792, %v819
    %v821 = vcombine.high %v799, %v799
    %v822 = vcombine.high %v806, %v806
    %v823 = vcombine.high %v813, %v813
    %v824 = vcombine.high %v820, %v820
    %v825 = vlaneseq
    %v826 = vshrl.u32 %v825, 7
    %v827 = vsub.s32 0, %v826
    %v828 = vrot.slane %v799, %v827
    %v829 = vlaneseq
    %v830 = vshrl.u32 %v829, 7
    %v831 = vsub.s32 0, %v830
    %v832 = vrot.slane %v813, %v831
    %v833 = vlaneseq
    %v834 = vshrl.u32 %v833, 7
    %v835 = vsub.s32 0, %v834
    %v836 = vrot.slane %v821, %v835
    %v837 = vlaneseq
    %v838 = vshrl.u32 %v837, 7
    %v839 = vsub.s32 0, %v838
    %v840 = vrot.slane %v823, %v839
    %v841 = vlaneseq
    %v842 = vshrl.u32 %v841, 7
    %v843 = vsub.s32 0, %v842
    %v844 = vrot.slane %v806, %v843
    %v845 = vlaneseq
    %v846 = vshrl.u32 %v845, 7
    %v847 = vsub.s32 0, %v846
    %v848 = vrot.slane %v820, %v847
    %v849 = vlaneseq
    %v850 = vshrl.u32 %v849, 7
    %v851 = vsub.s32 0, %v850
    %v852 = vrot.slane %v822, %v851
    %v853 = vlaneseq
    %v854 = vshrl.u32 %v853, 7
    %v855 = vsub.s32 0, %v854
    %v856 = vrot.slane %v824, %v855
    %v865 = vadd.f32 %v639, %v828
    %v866 = vadd.f32 %v644, %v832
    %v867 = vadd.f32 %v649, %v836
    %v868 = vadd.f32 %v654, %v840
    %v869 = vadd.f32 %v659, %v844
    %v870 = vadd.f32 %v664, %v848
    %v871 = vadd.f32 %v669, %v852
    %v872 = vadd.f32 %v674, %v856
    %v873 = vmax.f32 %v865, 0.0
    %v874 = vmax.f32 %v866, 0.0
    %v875 = vmax.f32 %v867, 0.0
    %v876 = vmax.f32 %v868, 0.0
    %v877 = vmax.f32 %v869, 0.0
    %v878 = vmax.f32 %v870, 0.0
    %v879 = vmax.f32 %v871, 0.0
    %v880 = vmax.f32 %v872, 0.0
    %v881 = vld [vmem:[%s9] sm:$0xff]
    %v882 = vld [vmem:[%s9 + $0x8] sm:$0xff]
    %v883 = vld [vmem:[%s9 + $0x10] sm:$0xff]
    %v884 = vld [vmem:[%s9 + $0x18] sm:$0xff]
    %v885 = vld [vmem:[#allocation12] sm:$0x1]
    %v887 = vlaneseq
    %v888 = vshrl.u32 %v887, 7
    %v889 = vsub.s32 0, %v888
    %v890 = vrot.slane %v885, %v889
    %v893 = vsel %vm471, %v873, 0
    %v896 = vsel %vm471, %v874, 0
    %v899 = vsel %vm471, %v875, 0
    %v902 = vsel %vm471, %v876, 0
    %v905 = vsel %vm471, %v877, 0
    %v908 = vsel %vm471, %v878, 0
    %v911 = vsel %vm471, %v879, 0
    %v914 = vsel %vm471, %v880, 0
    %916 = vmatprep.subr.mxu0 0.0
    %917 = vmatpush1.msra.mxu0 %v881
    %918 = vmatprep.subr.mxu0 0.0
    %919 = vmatpush1.msra.mxu0 %v882
    %920 = vmatprep.subr.mxu0 0.0
    %921 = vmatpush1.msra.mxu0 %v883
    %922 = vmatprep.subr.mxu0 0.0
    %923 = vmatpush1.msra.mxu0 %v884
    %924 = vmatprep.subr.mxu0 0.0
    %925 = vmatpush1.msra.mxu0 0.0
    %926 = vmatprep.subr.mxu0 0.0
    %927 = vmatpush1.msra.mxu0 0.0
    %928 = vmatprep.subr.mxu0 0.0
    %929 = vmatpush1.msra.mxu0 0.0
    %930 = vmatprep.subr.mxu0 0.0
    %931 = vmatpush1.msra.mxu0 0.0
    %932 = vmatprep.subr.mxu0 0.0
    %933 = vmatpush1.msra.mxu0 0.0
    %934 = vmatprep.subr.mxu0 0.0
    %935 = vmatpush1.msra.mxu0 0.0
    %936 = vmatprep.subr.mxu0 0.0
    %937 = vmatpush1.msra.mxu0 0.0
    %938 = vmatprep.subr.mxu0 0.0
    %939 = vmatpush1.msra.mxu0 0.0
    %940 = vmatprep.subr.mxu0 0.0
    %941 = vmatpush1.msra.mxu0 0.0
    %942 = vmatprep.subr.mxu0 0.0
    %943 = vmatpush1.msra.mxu0 0.0
    %944 = vmatprep.subr.mxu0 0.0
    %945 = vmatpush1.msra.mxu0 0.0
    %946 = vmatprep.subr.mxu0 0.0
    %947 = vmatpush1.msra.mxu0 0.0
    %948 = vmatprep.subr.mxu0 0.0
    %949 = vmatpush1.msra.mxu0 0.0
    %950 = vmatprep.subr.mxu0 0.0
    %951 = vmatpush1.msra.mxu0 0.0
    %952 = vmatprep.subr.mxu0 0.0
    %953 = vmatpush1.msra.mxu0 0.0
    %954 = vmatprep.subr.mxu0 0.0
    %955 = vmatpush1.msra.mxu0 0.0
    %956 = vmatprep.subr.mxu0 0.0
    %957 = vmatpush1.msra.mxu0 0.0
    %958 = vmatprep.subr.mxu0 0.0
    %959 = vmatpush1.msra.mxu0 0.0
    %960 = vmatprep.subr.mxu0 0.0
    %961 = vmatpush1.msra.mxu0 0.0
    %962 = vmatprep.subr.mxu0 0.0
    %963 = vmatpush1.msra.mxu0 0.0
    %964 = vmatprep.subr.mxu0 0.0
    %965 = vmatpush1.msra.mxu0 0.0
    %966 = vmatprep.subr.mxu0 0.0
    %967 = vmatpush1.msra.mxu0 0.0
    %968 = vmatprep.subr.mxu0 0.0
    %969 = vmatpush1.msra.mxu0 0.0
    %970 = vmatprep.subr.mxu0 0.0
    %971 = vmatpush1.msra.mxu0 0.0
    %972 = vmatprep.subr.mxu0 0.0
    %973 = vmatpush1.msra.mxu0 0.0
    %974 = vmatprep.subr.mxu0 0.0
    %975 = vmatpush1.msra.mxu0 0.0
    %976 = vmatprep.subr.mxu0 0.0
    %977 = vmatpush1.msra.mxu0 0.0
    %978 = vmatprep.subr.mxu0 0.0
    %979 = vmatpush1.msra.mxu0 0.0
    %980 = vmatprep.mubr.f32.mxu0 0.0
    %981 = vmatmul.mubr.f32.gmra.mrb[0].mxu0 %v893
    %v982 = vpop.f32.mrb[0].mxu0
    %v983 = vadd.f32 %v890, %v982
    %v984 = vpop.f32.mrb[0].mxu0
    %985 = vmatprep.mubr.f32.mxu0 0.0
    %986 = vmatmul.mubr.f32.gmra.mrb[0].mxu0 %v896
    %v987 = vpop.f32.mrb[0].mxu0
    %v988 = vadd.f32 %v890, %v987
    %v989 = vpop.f32.mrb[0].mxu0
    %990 = vmatprep.mubr.f32.mxu0 0.0
    %991 = vmatmul.mubr.f32.gmra.mrb[0].mxu0 %v899
    %v992 = vpop.f32.mrb[0].mxu0
    %v993 = vadd.f32 %v890, %v992
    %v994 = vpop.f32.mrb[0].mxu0
    %995 = vmatprep.mubr.f32.mxu0 0.0
    %996 = vmatmul.mubr.f32.gmra.mrb[0].mxu0 %v902
    %v997 = vpop.f32.mrb[0].mxu0
    %v998 = vadd.f32 %v890, %v997
    %v999 = vpop.f32.mrb[0].mxu0
    %1000 = vmatprep.mubr.f32.mxu0 0.0
    %1001 = vmatmul.mubr.f32.gmra.mrb[0].mxu0 %v905
    %v1002 = vpop.f32.mrb[0].mxu0
    %v1003 = vadd.f32 %v890, %v1002
    %v1004 = vpop.f32.mrb[0].mxu0
    %1005 = vmatprep.mubr.f32.mxu0 0.0
    %1006 = vmatmul.mubr.f32.gmra.mrb[0].mxu0 %v908
    %v1007 = vpop.f32.mrb[0].mxu0
    %v1008 = vadd.f32 %v890, %v1007
    %v1009 = vpop.f32.mrb[0].mxu0
    %1010 = vmatprep.mubr.f32.mxu0 0.0
    %1011 = vmatmul.mubr.f32.gmra.mrb[0].mxu0 %v911
    %v1012 = vpop.f32.mrb[0].mxu0
    %v1013 = vadd.f32 %v890, %v1012
    %v1014 = vpop.f32.mrb[0].mxu0
    %1015 = vmatprep.mubr.f32.mxu0 0.0
    %1016 = vmatmul.mubr.f32.gmra.mrb[0].mxu0 %v914
    %v1017 = vpop.f32.mrb[0].mxu0
    %v1018 = vadd.f32 %v890, %v1017
    %v1019 = vpop.f32.mrb[0].mxu0
    %1020 = vdwg.mxu0
    %v1021 = vld [vmem:[%s11] sm:$0xff]
    %v1022 = vld [vmem:[%s11 + $0x8] sm:$0xff]
    %v1023 = vld [vmem:[%s11 + $0x10] sm:$0xff]
    %v1024 = vld [vmem:[%s11 + $0x18] sm:$0xff]
    %v1025 = vld [vmem:[#allocation13] sm:$0x1]
    %v1027 = vlaneseq
    %v1028 = vshrl.u32 %v1027, 7
    %v1029 = vsub.s32 0, %v1028
    %v1030 = vrot.slane %v1025, %v1029
    %1032 = vrot.lane.b32.xlu0 %v873, 96
    %v1033 = vpop.permute.xlu0 %1032
    %1034 = vrot.lane.b32.xlu0 %v874, 96
    %v1035 = vpop.permute.xlu0 %1034
    %1036 = vrot.lane.b32.xlu0 %v875, 96
    %v1037 = vpop.permute.xlu0 %1036
    %1038 = vrot.lane.b32.xlu0 %v876, 96
    %v1039 = vpop.permute.xlu0 %1038
    %1040 = vrot.lane.b32.xlu0 %v877, 96
    %v1041 = vpop.permute.xlu0 %1040
    %1042 = vrot.lane.b32.xlu0 %v878, 96
    %v1043 = vpop.permute.xlu0 %1042
    %1044 = vrot.lane.b32.xlu0 %v879, 96
    %v1045 = vpop.permute.xlu0 %1044
    %1046 = vrot.lane.b32.xlu0 %v880, 96
    %v1047 = vpop.permute.xlu0 %1046
    %v1048 = vsel %vm471, %v1033, 0
    %v1050 = vsel %vm471, %v1035, 0
    %v1052 = vsel %vm471, %v1037, 0
    %v1054 = vsel %vm471, %v1039, 0
    %v1056 = vsel %vm471, %v1041, 0
    %v1058 = vsel %vm471, %v1043, 0
    %v1060 = vsel %vm471, %v1045, 0
    %v1062 = vsel %vm471, %v1047, 0
    %1064 = vmatprep.subr.mxu0 0.0
    %1065 = vmatpush1.msra.mxu0 %v1021
    %1066 = vmatprep.subr.mxu0 0.0
    %1067 = vmatpush1.msra.mxu0 %v1022
    %1068 = vmatprep.subr.mxu0 0.0
    %1069 = vmatpush1.msra.mxu0 %v1023
    %1070 = vmatprep.subr.mxu0 0.0
    %1071 = vmatpush1.msra.mxu0 %v1024
    %1072 = vmatprep.subr.mxu0 0.0
    %1073 = vmatpush1.msra.mxu0 0.0
    %1074 = vmatprep.subr.mxu0 0.0
    %1075 = vmatpush1.msra.mxu0 0.0
    %1076 = vmatprep.subr.mxu0 0.0
    %1077 = vmatpush1.msra.mxu0 0.0
    %1078 = vmatprep.subr.mxu0 0.0
    %1079 = vmatpush1.msra.mxu0 0.0
    %1080 = vmatprep.subr.mxu0 0.0
    %1081 = vmatpush1.msra.mxu0 0.0
    %1082 = vmatprep.subr.mxu0 0.0
    %1083 = vmatpush1.msra.mxu0 0.0
    %1084 = vmatprep.subr.mxu0 0.0
    %1085 = vmatpush1.msra.mxu0 0.0
    %1086 = vmatprep.subr.mxu0 0.0
    %1087 = vmatpush1.msra.mxu0 0.0
    %1088 = vmatprep.subr.mxu0 0.0
    %1089 = vmatpush1.msra.mxu0 0.0
    %1090 = vmatprep.subr.mxu0 0.0
    %1091 = vmatpush1.msra.mxu0 0.0
    %1092 = vmatprep.subr.mxu0 0.0
    %1093 = vmatpush1.msra.mxu0 0.0
    %1094 = vmatprep.subr.mxu0 0.0
    %1095 = vmatpush1.msra.mxu0 0.0
    %1096 = vmatprep.subr.mxu0 0.0
    %1097 = vmatpush1.msra.mxu0 0.0
    %1098 = vmatprep.subr.mxu0 0.0
    %1099 = vmatpush1.msra.mxu0 0.0
    %1100 = vmatprep.subr.mxu0 0.0
    %1101 = vmatpush1.msra.mxu0 0.0
    %1102 = vmatprep.subr.mxu0 0.0
    %1103 = vmatpush1.msra.mxu0 0.0
    %1104 = vmatprep.subr.mxu0 0.0
    %1105 = vmatpush1.msra.mxu0 0.0
    %1106 = vmatprep.subr.mxu0 0.0
    %1107 = vmatpush1.msra.mxu0 0.0
    %1108 = vmatprep.subr.mxu0 0.0
    %1109 = vmatpush1.msra.mxu0 0.0
    %1110 = vmatprep.subr.mxu0 0.0
    %1111 = vmatpush1.msra.mxu0 0.0
    %1112 = vmatprep.subr.mxu0 0.0
    %1113 = vmatpush1.msra.mxu0 0.0
    %1114 = vmatprep.subr.mxu0 0.0
    %1115 = vmatpush1.msra.mxu0 0.0
    %1116 = vmatprep.subr.mxu0 0.0
    %1117 = vmatpush1.msra.mxu0 0.0
    %1118 = vmatprep.subr.mxu0 0.0
    %1119 = vmatpush1.msra.mxu0 0.0
    %1120 = vmatprep.subr.mxu0 0.0
    %1121 = vmatpush1.msra.mxu0 0.0
    %1122 = vmatprep.subr.mxu0 0.0
    %1123 = vmatpush1.msra.mxu0 0.0
    %1124 = vmatprep.subr.mxu0 0.0
    %1125 = vmatpush1.msra.mxu0 0.0
    %1126 = vmatprep.subr.mxu0 0.0
    %1127 = vmatpush1.msra.mxu0 0.0
    %1128 = vmatprep.mubr.f32.mxu0 0.0
    %1129 = vmatmul.mubr.f32.gmra.mrb[0].mxu0 %v1048
    %v1130 = vpop.f32.mrb[0].mxu0
    %v1131 = vadd.f32 %v1030, %v1130
    %v1132 = vpop.f32.mrb[0].mxu0
    %1133 = vmatprep.mubr.f32.mxu0 0.0
    %1134 = vmatmul.mubr.f32.gmra.mrb[0].mxu0 %v1050
    %v1135 = vpop.f32.mrb[0].mxu0
    %v1136 = vadd.f32 %v1030, %v1135
    %v1137 = vpop.f32.mrb[0].mxu0
    %1138 = vmatprep.mubr.f32.mxu0 0.0
    %1139 = vmatmul.mubr.f32.gmra.mrb[0].mxu0 %v1052
    %v1140 = vpop.f32.mrb[0].mxu0
    %v1141 = vadd.f32 %v1030, %v1140
    %v1142 = vpop.f32.mrb[0].mxu0
    %1143 = vmatprep.mubr.f32.mxu0 0.0
    %1144 = vmatmul.mubr.f32.gmra.mrb[0].mxu0 %v1054
    %v1145 = vpop.f32.mrb[0].mxu0
    %v1146 = vadd.f32 %v1030, %v1145
    %v1147 = vpop.f32.mrb[0].mxu0
    %1148 = vmatprep.mubr.f32.mxu0 0.0
    %1149 = vmatmul.mubr.f32.gmra.mrb[0].mxu0 %v1056
    %v1150 = vpop.f32.mrb[0].mxu0
    %v1151 = vadd.f32 %v1030, %v1150
    %v1152 = vpop.f32.mrb[0].mxu0
    %1153 = vmatprep.mubr.f32.mxu0 0.0
    %1154 = vmatmul.mubr.f32.gmra.mrb[0].mxu0 %v1058
    %v1155 = vpop.f32.mrb[0].mxu0
    %v1156 = vadd.f32 %v1030, %v1155
    %v1157 = vpop.f32.mrb[0].mxu0
    %1158 = vmatprep.mubr.f32.mxu0 0.0
    %1159 = vmatmul.mubr.f32.gmra.mrb[0].mxu0 %v1060
    %v1160 = vpop.f32.mrb[0].mxu0
    %v1161 = vadd.f32 %v1030, %v1160
    %v1162 = vpop.f32.mrb[0].mxu0
    %1163 = vmatprep.mubr.f32.mxu0 0.0
    %1164 = vmatmul.mubr.f32.gmra.mrb[0].mxu0 %v1062
    %v1165 = vpop.f32.mrb[0].mxu0
    %v1166 = vadd.f32 %v1030, %v1165
    %v1167 = vpop.f32.mrb[0].mxu0
    %1168 = vdwg.mxu0
    %v1169 = vmax.f32 %v1131, 0.0
    %v1170 = vmax.f32 %v1136, 0.0
    %v1171 = vmax.f32 %v1141, 0.0
    %v1172 = vmax.f32 %v1146, 0.0
    %v1173 = vmax.f32 %v1151, 0.0
    %v1174 = vmax.f32 %v1156, 0.0
    %v1175 = vmax.f32 %v1161, 0.0
    %v1176 = vmax.f32 %v1166, 0.0
    %v1177 = vld [vmem:[%s13] sm:$0xff]
    %v1178 = vld [vmem:[%s13 + $0x8] sm:$0xff]
    %v1179 = vld [vmem:[%s13 + $0x10] sm:$0xff]
    %v1180 = vld [vmem:[%s13 + $0x18] sm:$0xff]
    %v1181 = vld [vmem:[#allocation2] sm:$0x1]
    %v1183 = vlaneseq
    %v1184 = vshrl.u32 %v1183, 7
    %v1185 = vsub.s32 0, %v1184
    %v1186 = vrot.slane %v1181, %v1185
    %v1189 = vsel %vm471, %v1169, 0
    %v1192 = vsel %vm471, %v1170, 0
    %v1195 = vsel %vm471, %v1171, 0
    %v1198 = vsel %vm471, %v1172, 0
    %v1201 = vsel %vm471, %v1173, 0
    %v1204 = vsel %vm471, %v1174, 0
    %v1207 = vsel %vm471, %v1175, 0
    %v1210 = vsel %vm471, %v1176, 0
    %1212 = vmatprep.subr.mxu0 0.0
    %1213 = vmatpush1.msra.mxu0 %v1177
    %1214 = vmatprep.subr.mxu0 0.0
    %1215 = vmatpush1.msra.mxu0 %v1178
    %1216 = vmatprep.subr.mxu0 0.0
    %1217 = vmatpush1.msra.mxu0 %v1179
    %1218 = vmatprep.subr.mxu0 0.0
    %1219 = vmatpush1.msra.mxu0 %v1180
    %1220 = vmatprep.subr.mxu0 0.0
    %1221 = vmatpush1.msra.mxu0 0.0
    %1222 = vmatprep.subr.mxu0 0.0
    %1223 = vmatpush1.msra.mxu0 0.0
    %1224 = vmatprep.subr.mxu0 0.0
    %1225 = vmatpush1.msra.mxu0 0.0
    %1226 = vmatprep.subr.mxu0 0.0
    %1227 = vmatpush1.msra.mxu0 0.0
    %1228 = vmatprep.subr.mxu0 0.0
    %1229 = vmatpush1.msra.mxu0 0.0
    %1230 = vmatprep.subr.mxu0 0.0
    %1231 = vmatpush1.msra.mxu0 0.0
    %1232 = vmatprep.subr.mxu0 0.0
    %1233 = vmatpush1.msra.mxu0 0.0
    %1234 = vmatprep.subr.mxu0 0.0
    %1235 = vmatpush1.msra.mxu0 0.0
    %1236 = vmatprep.subr.mxu0 0.0
    %1237 = vmatpush1.msra.mxu0 0.0
    %1238 = vmatprep.subr.mxu0 0.0
    %1239 = vmatpush1.msra.mxu0 0.0
    %1240 = vmatprep.subr.mxu0 0.0
    %1241 = vmatpush1.msra.mxu0 0.0
    %1242 = vmatprep.subr.mxu0 0.0
    %1243 = vmatpush1.msra.mxu0 0.0
    %1244 = vmatprep.subr.mxu0 0.0
    %1245 = vmatpush1.msra.mxu0 0.0
    %1246 = vmatprep.subr.mxu0 0.0
    %1247 = vmatpush1.msra.mxu0 0.0
    %1248 = vmatprep.subr.mxu0 0.0
    %1249 = vmatpush1.msra.mxu0 0.0
    %1250 = vmatprep.subr.mxu0 0.0
    %1251 = vmatpush1.msra.mxu0 0.0
    %1252 = vmatprep.subr.mxu0 0.0
    %1253 = vmatpush1.msra.mxu0 0.0
    %1254 = vmatprep.subr.mxu0 0.0
    %1255 = vmatpush1.msra.mxu0 0.0
    %1256 = vmatprep.subr.mxu0 0.0
    %1257 = vmatpush1.msra.mxu0 0.0
    %1258 = vmatprep.subr.mxu0 0.0
    %1259 = vmatpush1.msra.mxu0 0.0
    %1260 = vmatprep.subr.mxu0 0.0
    %1261 = vmatpush1.msra.mxu0 0.0
    %1262 = vmatprep.subr.mxu0 0.0
    %1263 = vmatpush1.msra.mxu0 0.0
    %1264 = vmatprep.subr.mxu0 0.0
    %1265 = vmatpush1.msra.mxu0 0.0
    %1266 = vmatprep.subr.mxu0 0.0
    %1267 = vmatpush1.msra.mxu0 0.0
    %1268 = vmatprep.subr.mxu0 0.0
    %1269 = vmatpush1.msra.mxu0 0.0
    %1270 = vmatprep.subr.mxu0 0.0
    %1271 = vmatpush1.msra.mxu0 0.0
    %1272 = vmatprep.subr.mxu0 0.0
    %1273 = vmatpush1.msra.mxu0 0.0
    %1274 = vmatprep.subr.mxu0 0.0
    %1275 = vmatpush1.msra.mxu0 0.0
    %1276 = vmatprep.mubr.f32.mxu0 0.0
    %1277 = vmatmul.mubr.f32.gmra.mrb[0].mxu0 %v1189
    %v1278 = vpop.f32.mrb[0].mxu0
    %v1279 = vadd.f32 %v1186, %v1278
    %v1280 = vpop.f32.mrb[0].mxu0
    %1281 = vmatprep.mubr.f32.mxu0 0.0
    %1282 = vmatmul.mubr.f32.gmra.mrb[0].mxu0 %v1192
    %v1283 = vpop.f32.mrb[0].mxu0
    %v1284 = vadd.f32 %v1186, %v1283
    %v1285 = vpop.f32.mrb[0].mxu0
    %1286 = vmatprep.mubr.f32.mxu0 0.0
    %1287 = vmatmul.mubr.f32.gmra.mrb[0].mxu0 %v1195
    %v1288 = vpop.f32.mrb[0].mxu0
    %v1289 = vadd.f32 %v1186, %v1288
    %v1290 = vpop.f32.mrb[0].mxu0
    %1291 = vmatprep.mubr.f32.mxu0 0.0
    %1292 = vmatmul.mubr.f32.gmra.mrb[0].mxu0 %v1198
    %v1293 = vpop.f32.mrb[0].mxu0
    %v1294 = vadd.f32 %v1186, %v1293
    %v1295 = vpop.f32.mrb[0].mxu0
    %1296 = vmatprep.mubr.f32.mxu0 0.0
    %1297 = vmatmul.mubr.f32.gmra.mrb[0].mxu0 %v1201
    %v1298 = vpop.f32.mrb[0].mxu0
    %v1299 = vadd.f32 %v1186, %v1298
    %v1300 = vpop.f32.mrb[0].mxu0
    %1301 = vmatprep.mubr.f32.mxu0 0.0
    %1302 = vmatmul.mubr.f32.gmra.mrb[0].mxu0 %v1204
    %v1303 = vpop.f32.mrb[0].mxu0
    %v1304 = vadd.f32 %v1186, %v1303
    %v1305 = vpop.f32.mrb[0].mxu0
    %1306 = vmatprep.mubr.f32.mxu0 0.0
    %1307 = vmatmul.mubr.f32.gmra.mrb[0].mxu0 %v1207
    %v1308 = vpop.f32.mrb[0].mxu0
    %v1309 = vadd.f32 %v1186, %v1308
    %v1310 = vpop.f32.mrb[0].mxu0
    %1311 = vmatprep.mubr.f32.mxu0 0.0
    %1312 = vmatmul.mubr.f32.gmra.mrb[0].mxu0 %v1210
    %v1313 = vpop.f32.mrb[0].mxu0
    %v1314 = vadd.f32 %v1186, %v1313
    %v1315 = vpop.f32.mrb[0].mxu0
    %1316 = vdwg.mxu0
    %v1317 = vmul.f32 %v1279, 1.442695
    %v1318 = vpow.pop %v1317
    %v1319 = vmul.f32 %v1284, 1.442695
    %v1320 = vpow.pop %v1319
    %v1321 = vmul.f32 %v1289, 1.442695
    %v1322 = vpow.pop %v1321
    %v1323 = vmul.f32 %v1294, 1.442695
    %v1324 = vpow.pop %v1323
    %v1325 = vmul.f32 %v1299, 1.442695
    %v1326 = vpow.pop %v1325
    %v1327 = vmul.f32 %v1304, 1.442695
    %v1328 = vpow.pop %v1327
    %v1329 = vmul.f32 %v1309, 1.442695
    %v1330 = vpow.pop %v1329
    %v1331 = vmul.f32 %v1314, 1.442695
    %v1332 = vpow.pop %v1331
    %vm1333 = vcmp.ne.f32.partialorder %v1279, 0.0
    %vm1334 = vcmp.ne.f32.partialorder %v1284, 0.0
    %vm1335 = vcmp.ne.f32.partialorder %v1289, 0.0
    %vm1336 = vcmp.ne.f32.partialorder %v1294, 0.0
    %vm1337 = vcmp.ne.f32.partialorder %v1299, 0.0
    %vm1338 = vcmp.ne.f32.partialorder %v1304, 0.0
    %vm1339 = vcmp.ne.f32.partialorder %v1309, 0.0
    %vm1340 = vcmp.ne.f32.partialorder %v1314, 0.0
    %v1341 = vsel %vm1333, 1, 0
    %v1342 = vsel %vm1334, 1, 0
    %v1343 = vsel %vm1335, 1, 0
    %v1344 = vsel %vm1336, 1, 0
    %v1345 = vsel %vm1337, 1, 0
    %v1346 = vsel %vm1338, 1, 0
    %v1347 = vsel %vm1339, 1, 0
    %v1348 = vsel %vm1340, 1, 0
    %v1349 = vcvt.s32.f32 %v1341
    %v1350 = vcvt.s32.f32 %v1342
    %v1351 = vcvt.s32.f32 %v1343
    %v1352 = vcvt.s32.f32 %v1344
    %v1353 = vcvt.s32.f32 %v1345
    %v1354 = vcvt.s32.f32 %v1346
    %v1355 = vcvt.s32.f32 %v1347
    %v1356 = vcvt.s32.f32 %v1348
    %v1357 = vmul.f32 %v1318, %v1349
    %v1358 = vmul.f32 %v1320, %v1350
    %v1359 = vmul.f32 %v1322, %v1351
    %v1360 = vmul.f32 %v1324, %v1352
    %v1361 = vmul.f32 %v1326, %v1353
    %v1362 = vmul.f32 %v1328, %v1354
    %v1363 = vmul.f32 %v1330, %v1355
    %v1364 = vmul.f32 %v1332, %v1356
    %vm1365 = vcmask 7168
    %v1366 = vsel %vm1365, %v1357, 0.0
    %v1367 = vrot.slane %v1366, 4
    %v1368 = vadd.f32 %v1366, %v1367
    %v1369 = vrot.slane %v1368, 2
    %v1370 = vadd.f32 %v1368, %v1369
    %v1371 = vrot.slane %v1370, 1
    %v1372 = vadd.f32 %v1370, %v1371
    %v1373 = vsel %vm1365, %v1358, 0.0
    %v1374 = vrot.slane %v1373, 4
    %v1375 = vadd.f32 %v1373, %v1374
    %v1376 = vrot.slane %v1375, 2
    %v1377 = vadd.f32 %v1375, %v1376
    %v1378 = vrot.slane %v1377, 1
    %v1379 = vadd.f32 %v1377, %v1378
    %v1380 = vsel %vm1365, %v1359, 0.0
    %v1381 = vrot.slane %v1380, 4
    %v1382 = vadd.f32 %v1380, %v1381
    %v1383 = vrot.slane %v1382, 2
    %v1384 = vadd.f32 %v1382, %v1383
    %v1385 = vrot.slane %v1384, 1
    %v1386 = vadd.f32 %v1384, %v1385
    %v1387 = vsel %vm1365, %v1360, 0.0
    %v1388 = vrot.slane %v1387, 4
    %v1389 = vadd.f32 %v1387, %v1388
    %v1390 = vrot.slane %v1389, 2
    %v1391 = vadd.f32 %v1389, %v1390
    %v1392 = vrot.slane %v1391, 1
    %v1393 = vadd.f32 %v1391, %v1392
    %v1394 = vsel %vm1365, %v1361, 0.0
    %v1395 = vrot.slane %v1394, 4
    %v1396 = vadd.f32 %v1394, %v1395
    %v1397 = vrot.slane %v1396, 2
    %v1398 = vadd.f32 %v1396, %v1397
    %v1399 = vrot.slane %v1398, 1
    %v1400 = vadd.f32 %v1398, %v1399
    %v1401 = vsel %vm1365, %v1362, 0.0
    %v1402 = vrot.slane %v1401, 4
    %v1403 = vadd.f32 %v1401, %v1402
    %v1404 = vrot.slane %v1403, 2
    %v1405 = vadd.f32 %v1403, %v1404
    %v1406 = vrot.slane %v1405, 1
    %v1407 = vadd.f32 %v1405, %v1406
    %v1408 = vsel %vm1365, %v1363, 0.0
    %v1409 = vrot.slane %v1408, 4
    %v1410 = vadd.f32 %v1408, %v1409
    %v1411 = vrot.slane %v1410, 2
    %v1412 = vadd.f32 %v1410, %v1411
    %v1413 = vrot.slane %v1412, 1
    %v1414 = vadd.f32 %v1412, %v1413
    %v1415 = vsel %vm1365, %v1364, 0.0
    %v1416 = vrot.slane %v1415, 4
    %v1417 = vadd.f32 %v1415, %v1416
    %v1418 = vrot.slane %v1417, 2
    %v1419 = vadd.f32 %v1417, %v1418
    %v1420 = vrot.slane %v1419, 1
    %v1421 = vadd.f32 %v1419, %v1420
    %1423 = vset.pattern.permute.xlu0 0
    %1424 = vperm.xlu0 %1423, %v1357
    %v1425 = vpop.permute.xlu0 %1424
    %1428 = vset.pattern.permute.xlu0 0
    %1429 = vperm.xlu0 %1428, %v1358
    %v1430 = vpop.permute.xlu0 %1429
    %1433 = vset.pattern.permute.xlu0 0
    %1434 = vperm.xlu0 %1433, %v1359
    %v1435 = vpop.permute.xlu0 %1434
    %1438 = vset.pattern.permute.xlu0 0
    %1439 = vperm.xlu0 %1438, %v1360
    %v1440 = vpop.permute.xlu0 %1439
    %1443 = vset.pattern.permute.xlu0 0
    %1444 = vperm.xlu0 %1443, %v1361
    %v1445 = vpop.permute.xlu0 %1444
    %1448 = vset.pattern.permute.xlu0 0
    %1449 = vperm.xlu0 %1448, %v1362
    %v1450 = vpop.permute.xlu0 %1449
    %1453 = vset.pattern.permute.xlu0 0
    %1454 = vperm.xlu0 %1453, %v1363
    %v1455 = vpop.permute.xlu0 %1454
    %1458 = vset.pattern.permute.xlu0 0
    %1459 = vperm.xlu0 %1458, %v1364
    %v1460 = vpop.permute.xlu0 %1459
    %v1462 = vmul.f32 %v1425, %v983
    %v1463 = vmul.f32 %v1430, %v988
    %v1464 = vmul.f32 %v1435, %v993
    %v1465 = vmul.f32 %v1440, %v998
    %v1466 = vmul.f32 %v1445, %v1003
    %v1467 = vmul.f32 %v1450, %v1008
    %v1468 = vmul.f32 %v1455, %v1013
    %v1469 = vmul.f32 %v1460, %v1018
    %v1470 = vsel %vm471, %v1462, 0.0
    %v1471 = vrot.slane %v1470, 4
    %v1472 = vadd.f32 %v1470, %v1471
    %v1473 = vrot.slane %v1472, 2
    %v1474 = vadd.f32 %v1472, %v1473
    %v1475 = vrot.slane %v1474, 1
    %v1476 = vadd.f32 %v1474, %v1475
    %v1477 = vsel %vm471, %v1463, 0.0
    %v1478 = vrot.slane %v1477, 4
    %v1479 = vadd.f32 %v1477, %v1478
    %v1480 = vrot.slane %v1479, 2
    %v1481 = vadd.f32 %v1479, %v1480
    %v1482 = vrot.slane %v1481, 1
    %v1483 = vadd.f32 %v1481, %v1482
    %v1484 = vsel %vm471, %v1464, 0.0
    %v1485 = vrot.slane %v1484, 4
    %v1486 = vadd.f32 %v1484, %v1485
    %v1487 = vrot.slane %v1486, 2
    %v1488 = vadd.f32 %v1486, %v1487
    %v1489 = vrot.slane %v1488, 1
    %v1490 = vadd.f32 %v1488, %v1489
    %v1491 = vsel %vm471, %v1465, 0.0
    %v1492 = vrot.slane %v1491, 4
    %v1493 = vadd.f32 %v1491, %v1492
    %v1494 = vrot.slane %v1493, 2
    %v1495 = vadd.f32 %v1493, %v1494
    %v1496 = vrot.slane %v1495, 1
    %v1497 = vadd.f32 %v1495, %v1496
    %v1498 = vsel %vm471, %v1466, 0.0
    %v1499 = vrot.slane %v1498, 4
    %v1500 = vadd.f32 %v1498, %v1499
    %v1501 = vrot.slane %v1500, 2
    %v1502 = vadd.f32 %v1500, %v1501
    %v1503 = vrot.slane %v1502, 1
    %v1504 = vadd.f32 %v1502, %v1503
    %v1505 = vsel %vm471, %v1467, 0.0
    %v1506 = vrot.slane %v1505, 4
    %v1507 = vadd.f32 %v1505, %v1506
    %v1508 = vrot.slane %v1507, 2
    %v1509 = vadd.f32 %v1507, %v1508
    %v1510 = vrot.slane %v1509, 1
    %v1511 = vadd.f32 %v1509, %v1510
    %v1512 = vsel %vm471, %v1468, 0.0
    %v1513 = vrot.slane %v1512, 4
    %v1514 = vadd.f32 %v1512, %v1513
    %v1515 = vrot.slane %v1514, 2
    %v1516 = vadd.f32 %v1514, %v1515
    %v1517 = vrot.slane %v1516, 1
    %v1518 = vadd.f32 %v1516, %v1517
    %v1519 = vsel %vm471, %v1469, 0.0
    %v1520 = vrot.slane %v1519, 4
    %v1521 = vadd.f32 %v1519, %v1520
    %v1522 = vrot.slane %v1521, 2
    %v1523 = vadd.f32 %v1521, %v1522
    %v1524 = vrot.slane %v1523, 1
    %v1525 = vadd.f32 %v1523, %v1524
    %v1526 = vrcp.pop %v1372
    %v1527 = vrcp.pop %v1379
    %v1528 = vrcp.pop %v1386
    %v1529 = vrcp.pop %v1393
    %v1530 = vrcp.pop %v1400
    %v1531 = vrcp.pop %v1407
    %v1532 = vrcp.pop %v1414
    %v1533 = vrcp.pop %v1421
    %1535 = vset.pattern.permute.xlu0 0
    %1536 = vperm.xlu0 %1535, %v1526
    %v1537 = vpop.permute.xlu0 %1536
    %1540 = vset.pattern.permute.xlu0 0
    %1541 = vperm.xlu0 %1540, %v1527
    %v1542 = vpop.permute.xlu0 %1541
    %1545 = vset.pattern.permute.xlu0 0
    %1546 = vperm.xlu0 %1545, %v1528
    %v1547 = vpop.permute.xlu0 %1546
    %1550 = vset.pattern.permute.xlu0 0
    %1551 = vperm.xlu0 %1550, %v1529
    %v1552 = vpop.permute.xlu0 %1551
    %1555 = vset.pattern.permute.xlu0 0
    %1556 = vperm.xlu0 %1555, %v1530
    %v1557 = vpop.permute.xlu0 %1556
    %1560 = vset.pattern.permute.xlu0 0
    %1561 = vperm.xlu0 %1560, %v1531
    %v1562 = vpop.permute.xlu0 %1561
    %1565 = vset.pattern.permute.xlu0 0
    %1566 = vperm.xlu0 %1565, %v1532
    %v1567 = vpop.permute.xlu0 %1566
    %1570 = vset.pattern.permute.xlu0 0
    %1571 = vperm.xlu0 %1570, %v1533
    %v1572 = vpop.permute.xlu0 %1571
    %v1574 = vmul.f32 %v1476, %v1537
    %v1575 = vmul.f32 %v1483, %v1542
    %v1576 = vmul.f32 %v1490, %v1547
    %v1577 = vmul.f32 %v1497, %v1552
    %v1578 = vmul.f32 %v1504, %v1557
    %v1579 = vmul.f32 %v1511, %v1562
    %v1580 = vmul.f32 %v1518, %v1567
    %v1581 = vmul.f32 %v1525, %v1572
    %v1582 = vld [vmem:[#allocation4] sm:$0xff]
    %v1583 = vld [vmem:[#allocation15] sm:$0x3f]
    %v1584 = vld [vmem:[%s16] sm:$0xff]
    %v1585 = vld [vmem:[%s16 + $0x8] sm:$0xff]
    %v1586 = vld [vmem:[%s16 + $0x10] sm:$0xff]
    %v1587 = vld [vmem:[%s16 + $0x18] sm:$0xff]
    %v1596 = vsel %vm689, %v1575, %v1574
    %v1597 = vsel %vm691, %v1576, %v1596
    %v1598 = vsel %vm693, %v1577, %v1597
    %v1599 = vsel %vm695, %v1578, %v1598
    %v1600 = vsel %vm697, %v1579, %v1599
    %v1601 = vsel %vm699, %v1580, %v1600
    %v1602 = vsel %vm701, %v1581, %v1601
    %v1603 = vsel %vm471, %v1602, 0
    %1605 = vmatprep.subr.mxu0 0.0
    %1606 = vmatpush1.msra.mxu0 %v1584
    %1607 = vmatprep.subr.mxu0 0.0
    %1608 = vmatpush1.msra.mxu0 %v1585
    %1609 = vmatprep.subr.mxu0 0.0
    %1610 = vmatpush1.msra.mxu0 %v1586
    %1611 = vmatprep.subr.mxu0 0.0
    %1612 = vmatpush1.msra.mxu0 %v1587
    %1613 = vmatprep.subr.mxu0 0.0
    %1614 = vmatpush1.msra.mxu0 0.0
    %1615 = vmatprep.subr.mxu0 0.0
    %1616 = vmatpush1.msra.mxu0 0.0
    %1617 = vmatprep.subr.mxu0 0.0
    %1618 = vmatpush1.msra.mxu0 0.0
    %1619 = vmatprep.subr.mxu0 0.0
    %1620 = vmatpush1.msra.mxu0 0.0
    %1621 = vmatprep.subr.mxu0 0.0
    %1622 = vmatpush1.msra.mxu0 0.0
    %1623 = vmatprep.subr.mxu0 0.0
    %1624 = vmatpush1.msra.mxu0 0.0
    %1625 = vmatprep.subr.mxu0 0.0
    %1626 = vmatpush1.msra.mxu0 0.0
    %1627 = vmatprep.subr.mxu0 0.0
    %1628 = vmatpush1.msra.mxu0 0.0
    %1629 = vmatprep.subr.mxu0 0.0
    %1630 = vmatpush1.msra.mxu0 0.0
    %1631 = vmatprep.subr.mxu0 0.0
    %1632 = vmatpush1.msra.mxu0 0.0
    %1633 = vmatprep.subr.mxu0 0.0
    %1634 = vmatpush1.msra.mxu0 0.0
    %1635 = vmatprep.subr.mxu0 0.0
    %1636 = vmatpush1.msra.mxu0 0.0
    %1637 = vmatprep.subr.mxu0 0.0
    %1638 = vmatpush1.msra.mxu0 0.0
    %1639 = vmatprep.subr.mxu0 0.0
    %1640 = vmatpush1.msra.mxu0 0.0
    %1641 = vmatprep.subr.mxu0 0.0
    %1642 = vmatpush1.msra.mxu0 0.0
    %1643 = vmatprep.subr.mxu0 0.0
    %1644 = vmatpush1.msra.mxu0 0.0
    %1645 = vmatprep.subr.mxu0 0.0
    %1646 = vmatpush1.msra.mxu0 0.0
    %1647 = vmatprep.subr.mxu0 0.0
    %1648 = vmatpush1.msra.mxu0 0.0
    %1649 = vmatprep.subr.mxu0 0.0
    %1650 = vmatpush1.msra.mxu0 0.0
    %1651 = vmatprep.subr.mxu0 0.0
    %1652 = vmatpush1.msra.mxu0 0.0
    %1653 = vmatprep.subr.mxu0 0.0
    %1654 = vmatpush1.msra.mxu0 0.0
    %1655 = vmatprep.subr.mxu0 0.0
    %1656 = vmatpush1.msra.mxu0 0.0
    %1657 = vmatprep.subr.mxu0 0.0
    %1658 = vmatpush1.msra.mxu0 0.0
    %1659 = vmatprep.subr.mxu0 0.0
    %1660 = vmatpush1.msra.mxu0 0.0
    %1661 = vmatprep.subr.mxu0 0.0
    %1662 = vmatpush1.msra.mxu0 0.0
    %1663 = vmatprep.subr.mxu0 0.0
    %1664 = vmatpush1.msra.mxu0 0.0
    %1665 = vmatprep.subr.mxu0 0.0
    %1666 = vmatpush1.msra.mxu0 0.0
    %1667 = vmatprep.subr.mxu0 0.0
    %1668 = vmatpush1.msra.mxu0 0.0
    %1669 = vmatprep.mubr.f32.mxu0 0.0
    %1670 = vmatmul.mubr.f32.gmra.mrb[0].mxu0 %v1603
    %v1671 = vpop.f32.mrb[0].mxu0
    %v1672 = vadd.f32 0.0, %v1671
    %v1673 = vpop.f32.mrb[0].mxu0
    %1674 = vdwg.mxu0
    %vm1675 = vcmask 48128
    %v1677 = vsel %vm1675, %v1582, 0
    %vm1679 = vcmask 1045504
    %v1681 = vsel %vm1679, %v1583, 0
    %1683 = vmatprep.subr.mxu0 0.0
    %1684 = vmatpush1.msra.mxu0 %v1681
    %1685 = vmatprep.subr.mxu0 0.0
    %1686 = vmatpush1.msra.mxu0 0.0
    %1687 = vmatprep.subr.mxu0 0.0
    %1688 = vmatpush1.msra.mxu0 0.0
    %1689 = vmatprep.subr.mxu0 0.0
    %1690 = vmatpush1.msra.mxu0 0.0
    %1691 = vmatprep.subr.mxu0 0.0
    %1692 = vmatpush1.msra.mxu0 0.0
    %1693 = vmatprep.subr.mxu0 0.0
    %1694 = vmatpush1.msra.mxu0 0.0
    %1695 = vmatprep.subr.mxu0 0.0
    %1696 = vmatpush1.msra.mxu0 0.0
    %1697 = vmatprep.subr.mxu0 0.0
    %1698 = vmatpush1.msra.mxu0 0.0
    %1699 = vmatprep.subr.mxu0 0.0
    %1700 = vmatpush1.msra.mxu0 0.0
    %1701 = vmatprep.subr.mxu0 0.0
    %1702 = vmatpush1.msra.mxu0 0.0
    %1703 = vmatprep.subr.mxu0 0.0
    %1704 = vmatpush1.msra.mxu0 0.0
    %1705 = vmatprep.subr.mxu0 0.0
    %1706 = vmatpush1.msra.mxu0 0.0
    %1707 = vmatprep.subr.mxu0 0.0
    %1708 = vmatpush1.msra.mxu0 0.0
    %1709 = vmatprep.subr.mxu0 0.0
    %1710 = vmatpush1.msra.mxu0 0.0
    %1711 = vmatprep.subr.mxu0 0.0
    %1712 = vmatpush1.msra.mxu0 0.0
    %1713 = vmatprep.subr.mxu0 0.0
    %1714 = vmatpush1.msra.mxu0 0.0
    %1715 = vmatprep.subr.mxu0 0.0
    %1716 = vmatpush1.msra.mxu0 0.0
    %1717 = vmatprep.subr.mxu0 0.0
    %1718 = vmatpush1.msra.mxu0 0.0
    %1719 = vmatprep.subr.mxu0 0.0
    %1720 = vmatpush1.msra.mxu0 0.0
    %1721 = vmatprep.subr.mxu0 0.0
    %1722 = vmatpush1.msra.mxu0 0.0
    %1723 = vmatprep.subr.mxu0 0.0
    %1724 = vmatpush1.msra.mxu0 0.0
    %1725 = vmatprep.subr.mxu0 0.0
    %1726 = vmatpush1.msra.mxu0 0.0
    %1727 = vmatprep.subr.mxu0 0.0
    %1728 = vmatpush1.msra.mxu0 0.0
    %1729 = vmatprep.subr.mxu0 0.0
    %1730 = vmatpush1.msra.mxu0 0.0
    %1731 = vmatprep.subr.mxu0 0.0
    %1732 = vmatpush1.msra.mxu0 0.0
    %1733 = vmatprep.subr.mxu0 0.0
    %1734 = vmatpush1.msra.mxu0 0.0
    %1735 = vmatprep.subr.mxu0 0.0
    %1736 = vmatpush1.msra.mxu0 0.0
    %1737 = vmatprep.subr.mxu0 0.0
    %1738 = vmatpush1.msra.mxu0 0.0
    %1739 = vmatprep.subr.mxu0 0.0
    %1740 = vmatpush1.msra.mxu0 0.0
    %1741 = vmatprep.subr.mxu0 0.0
    %1742 = vmatpush1.msra.mxu0 0.0
    %1743 = vmatprep.subr.mxu0 0.0
    %1744 = vmatpush1.msra.mxu0 0.0
    %1745 = vmatprep.subr.mxu0 0.0
    %1746 = vmatpush1.msra.mxu0 0.0
    %1747 = vmatprep.mubr.f32.mxu0 0.0
    %1748 = vmatmul.mubr.f32.gmra.mrb[0].mxu0 %v1677
    %v1749 = vpop.f32.mrb[0].mxu0
    %v1750 = vadd.f32 %v1672, %v1749
    %v1751 = vpop.f32.mrb[0].mxu0
    %1752 = vdwg.mxu0
    %v1753 = vld [vmem:[%s17] sm:$0x1]
    %v1755 = vlaneseq
    %v1756 = vshrl.u32 %v1755, 7
    %v1757 = vsub.s32 0, %v1756
    %v1758 = vrot.slane %v1753, %v1757
    %v1760 = vadd.f32 %v1750, %v1758
    %v1761 = vmax.f32 %v1760, 0.0
    %v1762 = vld [vmem:[%s18] sm:$0xff]
    %v1763 = vld [vmem:[%s18 + $0x8] sm:$0xff]
    %v1764 = vld [vmem:[%s18 + $0x10] sm:$0xff]
    %v1765 = vld [vmem:[%s18 + $0x18] sm:$0xff]
    %v1766 = vld [vmem:[%s18 + $0x20] sm:$0xff]
    %v1767 = vld [vmem:[%s18 + $0x28] sm:$0xff]
    %v1768 = vld [vmem:[%s18 + $0x30] sm:$0xff]
    %v1769 = vld [vmem:[%s18 + $0x38] sm:$0xff]
    %v1770 = vld [vmem:[%s19] sm:$0x1]
    %v1772 = vlaneseq
    %v1773 = vshrl.u32 %v1772, 7
    %v1774 = vsub.s32 0, %v1773
    %v1775 = vrot.slane %v1770, %v1774
    %v1778 = vsel %vm333, %v1761, 0
    %1780 = vmatprep.subr.mxu0 0.0
    %1781 = vmatpush1.msra.mxu0 %v1762
    %1782 = vmatprep.subr.mxu0 0.0
    %1783 = vmatpush1.msra.mxu0 %v1763
    %1784 = vmatprep.subr.mxu0 0.0
    %1785 = vmatpush1.msra.mxu0 %v1764
    %1786 = vmatprep.subr.mxu0 0.0
    %1787 = vmatpush1.msra.mxu0 %v1765
    %1788 = vmatprep.subr.mxu0 0.0
    %1789 = vmatpush1.msra.mxu0 %v1766
    %1790 = vmatprep.subr.mxu0 0.0
    %1791 = vmatpush1.msra.mxu0 %v1767
    %1792 = vmatprep.subr.mxu0 0.0
    %1793 = vmatpush1.msra.mxu0 %v1768
    %1794 = vmatprep.subr.mxu0 0.0
    %1795 = vmatpush1.msra.mxu0 %v1769
    %1796 = vmatprep.subr.mxu0 0.0
    %1797 = vmatpush1.msra.mxu0 0.0
    %1798 = vmatprep.subr.mxu0 0.0
    %1799 = vmatpush1.msra.mxu0 0.0
    %1800 = vmatprep.subr.mxu0 0.0
    %1801 = vmatpush1.msra.mxu0 0.0
    %1802 = vmatprep.subr.mxu0 0.0
    %1803 = vmatpush1.msra.mxu0 0.0
    %1804 = vmatprep.subr.mxu0 0.0
    %1805 = vmatpush1.msra.mxu0 0.0
    %1806 = vmatprep.subr.mxu0 0.0
    %1807 = vmatpush1.msra.mxu0 0.0
    %1808 = vmatprep.subr.mxu0 0.0
    %1809 = vmatpush1.msra.mxu0 0.0
    %1810 = vmatprep.subr.mxu0 0.0
    %1811 = vmatpush1.msra.mxu0 0.0
    %1812 = vmatprep.subr.mxu0 0.0
    %1813 = vmatpush1.msra.mxu0 0.0
    %1814 = vmatprep.subr.mxu0 0.0
    %1815 = vmatpush1.msra.mxu0 0.0
    %1816 = vmatprep.subr.mxu0 0.0
    %1817 = vmatpush1.msra.mxu0 0.0
    %1818 = vmatprep.subr.mxu0 0.0
    %1819 = vmatpush1.msra.mxu0 0.0
    %1820 = vmatprep.subr.mxu0 0.0
    %1821 = vmatpush1.msra.mxu0 0.0
    %1822 = vmatprep.subr.mxu0 0.0
    %1823 = vmatpush1.msra.mxu0 0.0
    %1824 = vmatprep.subr.mxu0 0.0
    %1825 = vmatpush1.msra.mxu0 0.0
    %1826 = vmatprep.subr.mxu0 0.0
    %1827 = vmatpush1.msra.mxu0 0.0
    %1828 = vmatprep.subr.mxu0 0.0
    %1829 = vmatpush1.msra.mxu0 0.0
    %1830 = vmatprep.subr.mxu0 0.0
    %1831 = vmatpush1.msra.mxu0 0.0
    %1832 = vmatprep.subr.mxu0 0.0
    %1833 = vmatpush1.msra.mxu0 0.0
    %1834 = vmatprep.subr.mxu0 0.0
    %1835 = vmatpush1.msra.mxu0 0.0
    %1836 = vmatprep.subr.mxu0 0.0
    %1837 = vmatpush1.msra.mxu0 0.0
    %1838 = vmatprep.subr.mxu0 0.0
    %1839 = vmatpush1.msra.mxu0 0.0
    %1840 = vmatprep.subr.mxu0 0.0
    %1841 = vmatpush1.msra.mxu0 0.0
    %1842 = vmatprep.subr.mxu0 0.0
    %1843 = vmatpush1.msra.mxu0 0.0
    %1844 = vmatprep.mubr.f32.mxu0 0.0
    %1845 = vmatmul.mubr.f32.gmra.mrb[0].mxu0 %v1778
    %v1846 = vpop.f32.mrb[0].mxu0
    %v1847 = vadd.f32 %v1775, %v1846
    %v1848 = vpop.f32.mrb[0].mxu0
    %1849 = vdwg.mxu0
    %v1850 = vmax.f32 %v1847, 0.0
    %v1851 = vld [vmem:[%s20] sm:$0x1]
    %v1852 = vld [vmem:[#allocation3] sm:$0x1]
    %1854 = vset.pattern.permute.xlu0 0
    %1855 = vperm.xlu0 %1854, %v1852
    %v1856 = vpop.permute.xlu0 %1855
    %v1858 = vlaneseq
    %v1859 = vshrl.u32 %v1858, 7
    %v1860 = vsub.s32 0, %v1859
    %v1861 = vrot.slane %v1856, %v1860
    %v1863 = vsel %vm471, %v1851, 0
    %v1866 = vsel %vm471, %v1850, 0
    %1868 = vmatprep.subr.mxu0 0.0
    %1869 = vmatpush1.xpose.msra.mxu0 %v1866
    %1870 = vmatprep.subr.mxu0 0.0
    %1871 = vmatpush1.xpose.msra.mxu0 0.0
    %1872 = vmatprep.subr.mxu0 0.0
    %1873 = vmatpush1.xpose.msra.mxu0 0.0
    %1874 = vmatprep.subr.mxu0 0.0
    %1875 = vmatpush1.xpose.msra.mxu0 0.0
    %1876 = vmatprep.subr.mxu0 0.0
    %1877 = vmatpush1.xpose.msra.mxu0 0.0
    %1878 = vmatprep.subr.mxu0 0.0
    %1879 = vmatpush1.xpose.msra.mxu0 0.0
    %1880 = vmatprep.subr.mxu0 0.0
    %1881 = vmatpush1.xpose.msra.mxu0 0.0
    %1882 = vmatprep.subr.mxu0 0.0
    %1883 = vmatpush1.xpose.msra.mxu0 0.0
    %1884 = vmatprep.subr.mxu0 0.0
    %1885 = vmatpush1.xpose.msra.mxu0 0.0
    %1886 = vmatprep.subr.mxu0 0.0
    %1887 = vmatpush1.xpose.msra.mxu0 0.0
    %1888 = vmatprep.subr.mxu0 0.0
    %1889 = vmatpush1.xpose.msra.mxu0 0.0
    %1890 = vmatprep.subr.mxu0 0.0
    %1891 = vmatpush1.xpose.msra.mxu0 0.0
    %1892 = vmatprep.subr.mxu0 0.0
    %1893 = vmatpush1.xpose.msra.mxu0 0.0
    %1894 = vmatprep.subr.mxu0 0.0
    %1895 = vmatpush1.xpose.msra.mxu0 0.0
    %1896 = vmatprep.subr.mxu0 0.0
    %1897 = vmatpush1.xpose.msra.mxu0 0.0
    %1898 = vmatprep.subr.mxu0 0.0
    %1899 = vmatpush1.xpose.msra.mxu0 0.0
    %1900 = vmatprep.subr.mxu0 0.0
    %1901 = vmatpush1.xpose.msra.mxu0 0.0
    %1902 = vmatprep.subr.mxu0 0.0
    %1903 = vmatpush1.xpose.msra.mxu0 0.0
    %1904 = vmatprep.subr.mxu0 0.0
    %1905 = vmatpush1.xpose.msra.mxu0 0.0
    %1906 = vmatprep.subr.mxu0 0.0
    %1907 = vmatpush1.xpose.msra.mxu0 0.0
    %1908 = vmatprep.subr.mxu0 0.0
    %1909 = vmatpush1.xpose.msra.mxu0 0.0
    %1910 = vmatprep.subr.mxu0 0.0
    %1911 = vmatpush1.xpose.msra.mxu0 0.0
    %1912 = vmatprep.subr.mxu0 0.0
    %1913 = vmatpush1.xpose.msra.mxu0 0.0
    %1914 = vmatprep.subr.mxu0 0.0
    %1915 = vmatpush1.xpose.msra.mxu0 0.0
    %1916 = vmatprep.subr.mxu0 0.0
    %1917 = vmatpush1.xpose.msra.mxu0 0.0
    %1918 = vmatprep.subr.mxu0 0.0
    %1919 = vmatpush1.xpose.msra.mxu0 0.0
    %1920 = vmatprep.subr.mxu0 0.0
    %1921 = vmatpush1.xpose.msra.mxu0 0.0
    %1922 = vmatprep.subr.mxu0 0.0
    %1923 = vmatpush1.xpose.msra.mxu0 0.0
    %1924 = vmatprep.subr.mxu0 0.0
    %1925 = vmatpush1.xpose.msra.mxu0 0.0
    %1926 = vmatprep.subr.mxu0 0.0
    %1927 = vmatpush1.xpose.msra.mxu0 0.0
    %1928 = vmatprep.subr.mxu0 0.0
    %1929 = vmatpush1.xpose.msra.mxu0 0.0
    %1930 = vmatprep.subr.mxu0 0.0
    %1931 = vmatpush1.xpose.msra.mxu0 0.0
    %1932 = vmatprep.mubr.f32.mxu0 0.0
    %1933 = vmatmul.mubr.f32.gmra.mrb[0].mxu0 %v1863
    %v1934 = vpop.f32.mrb[0].mxu0
    %v1935 = vadd.f32 %v1861, %v1934
    %v1936 = vpop.f32.mrb[0].mxu0
    %1937 = vdwg.mxu0
    %vm1938 = vcmask 57344
    %1939 = vst.msk [vmem:[#allocation16] sm:$0x1] %vm1938, %v1935
    // Predicated region
    $region118: #{tpu_custom_call.1} parent=1 // pred_check
      _
    $region119: #{tpu_custom_call.1} parent=1 // pred_check_branch
      %1941 = sbr.rel (0) target = $region121
    $region120: #{tpu_custom_call.1} parent=1 // pred_region
      %s1943 = ssub.s32 16, 16
      %1944 = vsyncadd [#allocation6], %s1943
      %s1946 = sshll.u32 [#allocation16], 4
      %s1947 = int_to_ptr.vmem [resolvable:$true] %s1946
      %1949 = dma.vmem_to_hbm [thread:$0]  %s1947, 16, %s22, [#allocation6]
    $region121: #{tpu_custom_call.1} parent=1 // pred_fallthru
      _
    // Predicated region
    $region122: #{tpu_custom_call.1} parent=1 // pred_check
      _
    $region123: #{tpu_custom_call.1} parent=1 // pred_check_branch
      %1951 = sbr.rel (0) target = $region125
    $region124: #{tpu_custom_call.1} parent=1 // pred_region
      %1952 = dma.done [#allocation6], 16
    $region125: #{tpu_custom_call.1} parent=1 // pred_fallthru
      _
    %1953 = vsyncpa [#allocation5], 1
    %1954 = vsyncpa [#allocation8], 1
    %1955 = vsyncpa [#allocation11], 1
    %1956 = vsyncpa [#allocation14], 1
    %1957 = vsyncpa [#allocation6], 1

</llo_original>
